<compile_context>
chip_gen: v7x
topology: tpu7x:2x2x1
jax: 0.10.0
libtpu: 0.0.40
codegen_flags: <defaults>
</compile_context>

<pallas_src>
import jax
import jax.numpy as jnp
from jax.experimental import pallas as pl
from jax.experimental.pallas import tpu as pltpu


def _fe_kernel(ts_ref, x0_ref, u_ref, w1x_ref, w1u_ref, b1_ref, w2_ref, b2_ref,
               out_ref, x_scr, uproj_scr):
    c = pl.program_id(1)                       # chunk index (innermost, in-order)
    T, Ng, n_x = out_ref.shape
    n_feat = w2_ref.shape[0]

    # (Re-)initialize the carried state at the start of each group's sequence.
    @pl.when(c == 0)
    def _():
        x_scr[...] = x0_ref[...].astype(jnp.float32)

    ts = ts_ref[0]                             # scalar from SMEM

    # Hoist loop-invariant weights; fold ts into the output path so the hot
    # loop avoids the extra dependent `ts * dx` multiply (perf review).
    w1x = w1x_ref[...].astype(jnp.float32)                          # (n_x, n_feat)
    w2_ts = ts * w2_ref[...].astype(jnp.float32)                    # (n_feat, n_x)
    b2_ts = jnp.broadcast_to(ts * b2_ref[...].astype(jnp.float32), (Ng, n_x))

    # Whole-chunk input projection u @ W1u + b1 as ONE rank-2 MXU matmul,
    # off the serial x_t -> x_{t+1} dependency chain.
    u_flat = u_ref[...].astype(jnp.float32)                         # (T*Ng, n_u)
    uproj = (jnp.dot(u_flat, w1u_ref[...].astype(jnp.float32),
                     preferred_element_type=jnp.float32)
             + b1_ref[...].astype(jnp.float32))                     # (T*Ng, n_feat)
    # No-op layout reshape when Ng % 8 == 0; enables cheap static-stride
    # first-axis indexing (uproj_scr[i]) on the critical path of every step.
    uproj_scr[...] = uproj.reshape(T, Ng, n_feat)

    # For tiny n_x realize x @ W1x as n_x broadcast-FMAs on the VPU instead of
    # a dependent MXU round-trip per serial step (latency-bound recurrence).
    use_vpu_w1x = n_x <= 8
    if use_vpu_w1x:
        w1x_rows = [w1x[k:k + 1, :] for k in range(n_x)]            # (1, n_feat) each

    def step(i, x):
        # Emit the state BEFORE the Euler update (matches the PyTorch module).
        out_ref[i] = x.astype(out_ref.dtype)
        pre = uproj_scr[i]                                          # (Ng, n_feat)
        if use_vpu_w1x:
            for k in range(n_x):
                pre = pre + x[:, k:k + 1] * w1x_rows[k]
        else:
            pre = pre + jnp.dot(x, w1x, preferred_element_type=jnp.float32)
        h = jnp.tanh(pre)
        # TODO(synk): benchmark a VPU/XLU lane-reduction path for h @ W2 on
        # v6e/v7x to drop the remaining per-step MXU round-trip.
        return x + (jnp.dot(h, w2_ts, preferred_element_type=jnp.float32) + b2_ts)

    # unroll raised 4 -> 8 (perf review): hides the step-i output store and
    # step-(i+1) uproj load under the dependent matmul + tanh latency.
    x_scr[...] = jax.lax.fori_loop(0, T, step, x_scr[...], unroll=min(8, T))


def forward_euler_simulate(x0, u, w1x, w1u, b1, w2, b2, ts=1.0, chunk=256, groups=1):
    """Forward-Euler simulation of dx = W2 @ tanh(W1x x + W1u u + b1) + b2.

    x0: (N, n_x), u: (L, N, n_u)  ->  states: (L, N, n_x)   (batch_first=False)

    `groups` splits the batch into independent recurrences handled on a leading
    "parallel" grid axis (both TensorCores on v7x; harmless on v5e/v6e).
    """
    L, N, n_u = u.shape
    n_x = x0.shape[1]
    n_feat = w1x.shape[1]

    G = int(groups)
    assert N % G == 0, "groups must divide the batch size"
    Ng = N // G

    # Balanced chunking: num_chunks = ceil(L/chunk), T = ceil(L/num_chunks), so
    # the total number of wasted (padded) serial Euler steps is < num_chunks.
    num_chunks = int(pl.cdiv(L, int(chunk)))
    T = int(pl.cdiv(L, num_chunks))
    L_pad = num_chunks * T
    if L_pad != L:
        u = jnp.pad(u, ((0, L_pad - L), (0, 0), (0, 0)))

    # Present u as (G, num_chunks, T*Ng, n_u): one contiguous rank-2 slab per
    # (group, chunk) so the chunk-wide input matmul needs no in-kernel reshape.
    u_g = (u.reshape(num_chunks, T, G, Ng, n_u)
            .transpose(2, 0, 1, 3, 4)
            .reshape(G, num_chunks, T * Ng, n_u))
    x0_g = x0.reshape(G, Ng, n_x)

    ts_arr = jnp.asarray([ts], dtype=jnp.float32)

    # TODO(synk): with n_x=3 / n_u=2 the lane axis is sparse (masked stores,
    # ~40-64x VMEM tile padding); a fully lane-dense (N*n_x / N*n_u) layout
    # needs an in-kernel relayout of the carried state and is left as follow-up.
    # When scaling chunk*N, re-check VMEM (v5e 16 MiB scoped default, v7x
    # 64 MiB physical) and set vmem_limit_bytes with headroom.
    out = pl.pallas_call(
        _fe_kernel,
        out_shape=jax.ShapeDtypeStruct((num_chunks, G, T, Ng, n_x), x0.dtype),
        grid_spec=pltpu.PrefetchScalarGridSpec(
            num_scalar_prefetch=0,
            grid=(G, num_chunks),                # (parallel group, sequential chunk)
            in_specs=[
                pl.BlockSpec(memory_space=pltpu.MemorySpace.SMEM),            # ts
                pl.BlockSpec((None, Ng, n_x), lambda g, c: (g, 0, 0)),        # x0
                pl.BlockSpec((None, None, T * Ng, n_u),
                             lambda g, c: (g, c, 0, 0)),                      # u chunk
                pl.BlockSpec((n_x, n_feat), lambda g, c: (0, 0)),             # W1x
                pl.BlockSpec((n_u, n_feat), lambda g, c: (0, 0)),             # W1u
                pl.BlockSpec((1, n_feat), lambda g, c: (0, 0)),               # b1
                pl.BlockSpec((n_feat, n_x), lambda g, c: (0, 0)),             # W2
                pl.BlockSpec((1, n_x), lambda g, c: (0, 0)),                  # b2
            ],
            out_specs=pl.BlockSpec((None, None, T, Ng, n_x),
                                   lambda g, c: (c, g, 0, 0, 0)),
            scratch_shapes=[
                pltpu.VMEM((Ng, n_x), jnp.float32),         # carried state x_t
                pltpu.VMEM((T, Ng, n_feat), jnp.float32),   # chunk u-projection
            ],
        ),
        compiler_params=pltpu.CompilerParams(
            dimension_semantics=("parallel", "arbitrary")),
    )(ts_arr, x0_g, u_g, w1x, w1u, b1, w2, b2)

    # (num_chunks, G, T, Ng, n_x) -> (L_pad, N, n_x); slice off padded steps.
    out = out.transpose(0, 2, 1, 3, 4).reshape(L_pad, N, n_x)
    return out[:L]


def _reference(x0, u, w1x, w1u, b1, w2, b2, ts=1.0):
    """Pure-JAX reference of the same forward pass."""
    def step(x, u_t):
        h = jnp.tanh(x @ w1x + u_t @ w1u + b1)
        dx = h @ w2 + b2
        return x + ts * dx, x
    _, states = jax.lax.scan(step, x0, u)
    return states


if __name__ == "__main__":
    key = jax.random.PRNGKey(0)
    k0, k1, k2, k3, k4, k5, k6 = jax.random.split(key, 7)

    # Shapes consistent with the module: n_x=3, n_u=2, ss_model hidden width 32.
    n_x, n_u, n_feat = 3, 2, 32
    ts = 0.05

    # Deterministic "small init" parameters (like torchid's init_small=True).
    w1x = 0.1 * jax.random.normal(k2, (n_x, n_feat), dtype=jnp.float32)
    w1u = 0.1 * jax.random.normal(k3, (n_u, n_feat), dtype=jnp.float32)
    b1 = 0.01 * jax.random.normal(k4, (1, n_feat), dtype=jnp.float32)
    w2 = 0.1 * jax.random.normal(k5, (n_feat, n_x), dtype=jnp.float32)
    b2 = 0.01 * jax.random.normal(k6, (1, n_x), dtype=jnp.float32)

    # --- Config A: L=8, N=8, single chunk, single group ---------------------
    L, N = 8, 8
    x0 = jax.random.normal(k0, (N, n_x), dtype=jnp.float32)
    u = jax.random.normal(k1, (L, N, n_u), dtype=jnp.float32)

    states = forward_euler_simulate(x0, u, w1x, w1u, b1, w2, b2, ts=ts)
    states = jax.block_until_ready(states)
    ref = _reference(x0, u, w1x, w1u, b1[0], w2, b2[0], ts=ts)
    assert states.shape == (L, N, n_x)
    assert jnp.allclose(states, ref, atol=2e-5, rtol=2e-5), "config A mismatch"

    # --- Config B: multi-chunk carry + balanced-T padding + 2 parallel groups
    L2, N2 = 11, 16
    x0b = jax.random.normal(k0, (N2, n_x), dtype=jnp.float32)
    ub = jax.random.normal(k1, (L2, N2, n_u), dtype=jnp.float32)

    states_b = forward_euler_simulate(x0b, ub, w1x, w1u, b1, w2, b2, ts=ts,
                                      chunk=4, groups=2)
    states_b = jax.block_until_ready(states_b)
    ref_b = _reference(x0b, ub, w1x, w1u, b1[0], w2, b2[0], ts=ts)
    assert states_b.shape == (L2, N2, n_x)
    assert jnp.allclose(states_b, ref_b, atol=2e-5, rtol=2e-5), "config B mismatch"

    print("KERNEL_OK")
</pallas_src>

<mosaic_0001>
module attributes {stable_mosaic.version = 11 : i64} {
  func.func @_fe_kernel(%arg0: i32, %arg1: i32, %arg2: memref<1xf32, #tpu.memory_space<smem>>, %arg3: memref<1x8x3xf32, #tpu.memory_space<vmem>>, %arg4: memref<1x1x64x2xf32, #tpu.memory_space<vmem>>, %arg5: memref<3x32xf32, #tpu.memory_space<vmem>>, %arg6: memref<2x32xf32, #tpu.memory_space<vmem>>, %arg7: memref<1x32xf32, #tpu.memory_space<vmem>>, %arg8: memref<32x3xf32, #tpu.memory_space<vmem>>, %arg9: memref<1x3xf32, #tpu.memory_space<vmem>>, %arg10: memref<1x1x8x8x3xf32, #tpu.memory_space<vmem>>, %arg11: memref<8x3xf32, #tpu.memory_space<vmem>>, %arg12: memref<8x8x32xf32, #tpu.memory_space<vmem>>) attributes {dimension_semantics = [#tpu.dimension_semantics<parallel>, #tpu.dimension_semantics<arbitrary>], iteration_bounds = array<i64: 1, 1>, scalar_prefetch = 0 : i64, scratch_operands = 2 : i64, tpu.core_type = #tpu.core_type<tc>, window_params = [{transform_indices = @transform_0, window_bounds = array<i64: 1>}, {transform_indices = @transform_1, window_bounds = array<i64: 1, 8, 3>}, {transform_indices = @transform_2, window_bounds = array<i64: 1, 1, 64, 2>}, {pipeline_mode = #tpu.pipeline_mode<synchronous>, transform_indices = @transform_3, window_bounds = array<i64: 3, 32>}, {pipeline_mode = #tpu.pipeline_mode<synchronous>, transform_indices = @transform_4, window_bounds = array<i64: 2, 32>}, {pipeline_mode = #tpu.pipeline_mode<synchronous>, transform_indices = @transform_5, window_bounds = array<i64: 1, 32>}, {pipeline_mode = #tpu.pipeline_mode<synchronous>, transform_indices = @transform_6, window_bounds = array<i64: 32, 3>}, {pipeline_mode = #tpu.pipeline_mode<synchronous>, transform_indices = @transform_7, window_bounds = array<i64: 1, 3>}, {transform_indices = @transform_8, window_bounds = array<i64: 1, 1, 8, 8, 3>}]} {
    %c0_i32 = arith.constant 0 : i32
    %0 = arith.cmpi eq, %arg1, %c0_i32 : i32
    %1 = arith.extui %0 : i1 to i32
    %c0_i32_0 = arith.constant 0 : i32
    %2 = arith.cmpi ne, %1, %c0_i32_0 : i32
    scf.if %2 {
      %c0_79 = arith.constant 0 : index
      %c0_80 = arith.constant 0 : index
      %c0_81 = arith.constant 0 : index
      %235 = vector.load %arg3[%c0_79, %c0_80, %c0_81] : memref<1x8x3xf32, #tpu.memory_space<vmem>>, vector<1x8x3xf32>
      %236 = vector.shape_cast %235 : vector<1x8x3xf32> to vector<8x3xf32>
      %c0_82 = arith.constant 0 : index
      %c0_83 = arith.constant 0 : index
      %237 = vector.load %arg11[%c0_82, %c0_83] : memref<8x3xf32, #tpu.memory_space<vmem>>, vector<8x3xf32>
      tpu.vector_store %arg11[%c0_82, %c0_83], %236 {strides = array<i32>} : memref<8x3xf32, #tpu.memory_space<vmem>>, vector<8x3xf32>,
    } else {
    }
    %c0 = arith.constant 0 : index
    %3 = memref.load %arg2[%c0] : memref<1xf32, #tpu.memory_space<smem>>
    %c0_1 = arith.constant 0 : index
    %c0_2 = arith.constant 0 : index
    %4 = vector.load %arg5[%c0_1, %c0_2] : memref<3x32xf32, #tpu.memory_space<vmem>>, vector<3x32xf32>
    %c0_3 = arith.constant 0 : index
    %c0_4 = arith.constant 0 : index
    %5 = vector.load %arg8[%c0_3, %c0_4] : memref<32x3xf32, #tpu.memory_space<vmem>>, vector<32x3xf32>
    %6 = vector.broadcast %3 : f32 to vector<32x3xf32>
    %7 = arith.mulf %6, %5 : vector<32x3xf32>
    %c0_5 = arith.constant 0 : index
    %c0_6 = arith.constant 0 : index
    %8 = vector.load %arg9[%c0_5, %c0_6] : memref<1x3xf32, #tpu.memory_space<vmem>>, vector<1x3xf32>
    %9 = vector.broadcast %3 : f32 to vector<1x3xf32>
    %10 = arith.mulf %9, %8 : vector<1x3xf32>
    %11 = vector.shape_cast %10 : vector<1x3xf32> to vector<1x3xf32>
    %12 = vector.broadcast %11 : vector<1x3xf32> to vector<8x3xf32>
    %c0_7 = arith.constant 0 : index
    %c0_8 = arith.constant 0 : index
    %c0_9 = arith.constant 0 : index
    %c0_10 = arith.constant 0 : index
    %13 = vector.load %arg4[%c0_7, %c0_8, %c0_9, %c0_10] : memref<1x1x64x2xf32, #tpu.memory_space<vmem>>, vector<1x1x64x2xf32>
    %14 = vector.shape_cast %13 : vector<1x1x64x2xf32> to vector<64x2xf32>
    %c0_11 = arith.constant 0 : index
    %c0_12 = arith.constant 0 : index
    %15 = vector.load %arg6[%c0_11, %c0_12] : memref<2x32xf32, #tpu.memory_space<vmem>>, vector<2x32xf32>
    %cst = arith.constant dense<0.000000e+00> : vector<64x32xf32>
    %16 = tpu.matmul %14, %15, %cst {dimension_numbers = #tpu.dot_dimension_numbers<[1], [0], [0], [1], [0, 0, 1, 1], [], []>} : vector<64x2xf32>, vector<2x32xf32>, vector<64x32xf32> -> vector<64x32xf32>
    %c0_13 = arith.constant 0 : index
    %c0_14 = arith.constant 0 : index
    %17 = vector.load %arg7[%c0_13, %c0_14] : memref<1x32xf32, #tpu.memory_space<vmem>>, vector<1x32xf32>
    %18 = vector.broadcast %17 : vector<1x32xf32> to vector<64x32xf32>
    %19 = arith.addf %16, %18 : vector<64x32xf32>
    %20 = vector.shape_cast %19 : vector<64x32xf32> to vector<8x8x32xf32>
    %c0_15 = arith.constant 0 : index
    %c0_16 = arith.constant 0 : index
    %c0_17 = arith.constant 0 : index
    %21 = vector.load %arg12[%c0_15, %c0_16, %c0_17] : memref<8x8x32xf32, #tpu.memory_space<vmem>>, vector<8x8x32xf32>
    tpu.vector_store %arg12[%c0_15, %c0_16, %c0_17], %20 {strides = array<i32>} : memref<8x8x32xf32, #tpu.memory_space<vmem>>, vector<8x8x32xf32>,
    %22 = vector.extract_strided_slice %4 {offsets = [0, 0], sizes = [1, 32], strides = [1, 1]} : vector<3x32xf32> to vector<1x32xf32>
    %23 = vector.extract_strided_slice %4 {offsets = [1, 0], sizes = [1, 32], strides = [1, 1]} : vector<3x32xf32> to vector<1x32xf32>
    %24 = vector.extract_strided_slice %4 {offsets = [2, 0], sizes = [1, 32], strides = [1, 1]} : vector<3x32xf32> to vector<1x32xf32>
    %c0_18 = arith.constant 0 : index
    %c0_19 = arith.constant 0 : index
    %25 = vector.load %arg11[%c0_18, %c0_19] : memref<8x3xf32, #tpu.memory_space<vmem>>, vector<8x3xf32>
    %c0_i32_20 = arith.constant 0 : i32
    %c0_21 = arith.constant 0 : index
    %c0_22 = arith.constant 0 : index
    %26 = arith.index_cast %c0_i32_20 : i32 to index
    %c0_23 = arith.constant 0 : index
    %c0_24 = arith.constant 0 : index
    %27 = vector.load %arg10[%c0_21, %c0_22, %26, %c0_23, %c0_24] : memref<1x1x8x8x3xf32, #tpu.memory_space<vmem>>, vector<1x1x1x8x3xf32>
    %28 = vector.shape_cast %27 : vector<1x1x1x8x3xf32> to vector<8x3xf32>
    %29 = vector.shape_cast %25 : vector<8x3xf32> to vector<1x1x1x8x3xf32>
    tpu.vector_store %arg10[%c0_21, %c0_22, %26, %c0_23, %c0_24], %29 {strides = array<i32>} : memref<1x1x8x8x3xf32, #tpu.memory_space<vmem>>, vector<1x1x1x8x3xf32>,
    %30 = arith.index_cast %c0_i32_20 : i32 to index
    %c0_25 = arith.constant 0 : index
    %c0_26 = arith.constant 0 : index
    %31 = vector.load %arg12[%30, %c0_25, %c0_26] : memref<8x8x32xf32, #tpu.memory_space<vmem>>, vector<1x8x32xf32>
    %32 = vector.shape_cast %31 : vector<1x8x32xf32> to vector<8x32xf32>
    %33 = vector.extract_strided_slice %25 {offsets = [0, 0], sizes = [8, 1], strides = [1, 1]} : vector<8x3xf32> to vector<8x1xf32>
    %34 = vector.broadcast %33 : vector<8x1xf32> to vector<8x32xf32>
    %35 = vector.broadcast %22 : vector<1x32xf32> to vector<8x32xf32>
    %36 = arith.mulf %34, %35 : vector<8x32xf32>
    %37 = arith.addf %32, %36 : vector<8x32xf32>
    %38 = vector.extract_strided_slice %25 {offsets = [0, 1], sizes = [8, 1], strides = [1, 1]} : vector<8x3xf32> to vector<8x1xf32>
    %39 = vector.broadcast %38 : vector<8x1xf32> to vector<8x32xf32>
    %40 = vector.broadcast %23 : vector<1x32xf32> to vector<8x32xf32>
    %41 = arith.mulf %39, %40 : vector<8x32xf32>
    %42 = arith.addf %37, %41 : vector<8x32xf32>
    %43 = vector.extract_strided_slice %25 {offsets = [0, 2], sizes = [8, 1], strides = [1, 1]} : vector<8x3xf32> to vector<8x1xf32>
    %44 = vector.broadcast %43 : vector<8x1xf32> to vector<8x32xf32>
    %45 = vector.broadcast %24 : vector<1x32xf32> to vector<8x32xf32>
    %46 = arith.mulf %44, %45 : vector<8x32xf32>
    %47 = arith.addf %42, %46 : vector<8x32xf32>
    %48 = math.tanh %47 : vector<8x32xf32>
    %cst_27 = arith.constant dense<0.000000e+00> : vector<8x3xf32>
    %49 = tpu.matmul %48, %7, %cst_27 {dimension_numbers = #tpu.dot_dimension_numbers<[1], [0], [0], [1], [0, 0, 1, 1], [], []>} : vector<8x32xf32>, vector<32x3xf32>, vector<8x3xf32> -> vector<8x3xf32>
    %50 = arith.addf %49, %12 : vector<8x3xf32>
    %51 = arith.addf %25, %50 : vector<8x3xf32>
    %c1_i32 = arith.constant 1 : i32
    %c0_28 = arith.constant 0 : index
    %c0_29 = arith.constant 0 : index
    %52 = arith.index_cast %c1_i32 : i32 to index
    %c0_30 = arith.constant 0 : index
    %c0_31 = arith.constant 0 : index
    %53 = vector.load %arg10[%c0_28, %c0_29, %52, %c0_30, %c0_31] : memref<1x1x8x8x3xf32, #tpu.memory_space<vmem>>, vector<1x1x1x8x3xf32>
    %54 = vector.shape_cast %53 : vector<1x1x1x8x3xf32> to vector<8x3xf32>
    %55 = vector.shape_cast %51 : vector<8x3xf32> to vector<1x1x1x8x3xf32>
    tpu.vector_store %arg10[%c0_28, %c0_29, %52, %c0_30, %c0_31], %55 {strides = array<i32>} : memref<1x1x8x8x3xf32, #tpu.memory_space<vmem>>, vector<1x1x1x8x3xf32>,
    %56 = arith.index_cast %c1_i32 : i32 to index
    %c0_32 = arith.constant 0 : index
    %c0_33 = arith.constant 0 : index
    %57 = vector.load %arg12[%56, %c0_32, %c0_33] : memref<8x8x32xf32, #tpu.memory_space<vmem>>, vector<1x8x32xf32>
    %58 = vector.shape_cast %57 : vector<1x8x32xf32> to vector<8x32xf32>
    %59 = vector.extract_strided_slice %51 {offsets = [0, 0], sizes = [8, 1], strides = [1, 1]} : vector<8x3xf32> to vector<8x1xf32>
    %60 = vector.broadcast %59 : vector<8x1xf32> to vector<8x32xf32>
    %61 = vector.broadcast %22 : vector<1x32xf32> to vector<8x32xf32>
    %62 = arith.mulf %60, %61 : vector<8x32xf32>
    %63 = arith.addf %58, %62 : vector<8x32xf32>
    %64 = vector.extract_strided_slice %51 {offsets = [0, 1], sizes = [8, 1], strides = [1, 1]} : vector<8x3xf32> to vector<8x1xf32>
    %65 = vector.broadcast %64 : vector<8x1xf32> to vector<8x32xf32>
    %66 = vector.broadcast %23 : vector<1x32xf32> to vector<8x32xf32>
    %67 = arith.mulf %65, %66 : vector<8x32xf32>
    %68 = arith.addf %63, %67 : vector<8x32xf32>
    %69 = vector.extract_strided_slice %51 {offsets = [0, 2], sizes = [8, 1], strides = [1, 1]} : vector<8x3xf32> to vector<8x1xf32>
    %70 = vector.broadcast %69 : vector<8x1xf32> to vector<8x32xf32>
    %71 = vector.broadcast %24 : vector<1x32xf32> to vector<8x32xf32>
    %72 = arith.mulf %70, %71 : vector<8x32xf32>
    %73 = arith.addf %68, %72 : vector<8x32xf32>
    %74 = math.tanh %73 : vector<8x32xf32>
    %cst_34 = arith.constant dense<0.000000e+00> : vector<8x3xf32>
    %75 = tpu.matmul %74, %7, %cst_34 {dimension_numbers = #tpu.dot_dimension_numbers<[1], [0], [0], [1], [0, 0, 1, 1], [], []>} : vector<8x32xf32>, vector<32x3xf32>, vector<8x3xf32> -> vector<8x3xf32>
    %76 = arith.addf %75, %12 : vector<8x3xf32>
    %77 = arith.addf %51, %76 : vector<8x3xf32>
    %c2_i32 = arith.constant 2 : i32
    %c0_35 = arith.constant 0 : index
    %c0_36 = arith.constant 0 : index
    %78 = arith.index_cast %c2_i32 : i32 to index
    %c0_37 = arith.constant 0 : index
    %c0_38 = arith.constant 0 : index
    %79 = vector.load %arg10[%c0_35, %c0_36, %78, %c0_37, %c0_38] : memref<1x1x8x8x3xf32, #tpu.memory_space<vmem>>, vector<1x1x1x8x3xf32>
    %80 = vector.shape_cast %79 : vector<1x1x1x8x3xf32> to vector<8x3xf32>
    %81 = vector.shape_cast %77 : vector<8x3xf32> to vector<1x1x1x8x3xf32>
    tpu.vector_store %arg10[%c0_35, %c0_36, %78, %c0_37, %c0_38], %81 {strides = array<i32>} : memref<1x1x8x8x3xf32, #tpu.memory_space<vmem>>, vector<1x1x1x8x3xf32>,
    %82 = arith.index_cast %c2_i32 : i32 to index
    %c0_39 = arith.constant 0 : index
    %c0_40 = arith.constant 0 : index
    %83 = vector.load %arg12[%82, %c0_39, %c0_40] : memref<8x8x32xf32, #tpu.memory_space<vmem>>, vector<1x8x32xf32>
    %84 = vector.shape_cast %83 : vector<1x8x32xf32> to vector<8x32xf32>
    %85 = vector.extract_strided_slice %77 {offsets = [0, 0], sizes = [8, 1], strides = [1, 1]} : vector<8x3xf32> to vector<8x1xf32>
    %86 = vector.broadcast %85 : vector<8x1xf32> to vector<8x32xf32>
    %87 = vector.broadcast %22 : vector<1x32xf32> to vector<8x32xf32>
    %88 = arith.mulf %86, %87 : vector<8x32xf32>
    %89 = arith.addf %84, %88 : vector<8x32xf32>
    %90 = vector.extract_strided_slice %77 {offsets = [0, 1], sizes = [8, 1], strides = [1, 1]} : vector<8x3xf32> to vector<8x1xf32>
    %91 = vector.broadcast %90 : vector<8x1xf32> to vector<8x32xf32>
    %92 = vector.broadcast %23 : vector<1x32xf32> to vector<8x32xf32>
    %93 = arith.mulf %91, %92 : vector<8x32xf32>
    %94 = arith.addf %89, %93 : vector<8x32xf32>
    %95 = vector.extract_strided_slice %77 {offsets = [0, 2], sizes = [8, 1], strides = [1, 1]} : vector<8x3xf32> to vector<8x1xf32>
    %96 = vector.broadcast %95 : vector<8x1xf32> to vector<8x32xf32>
    %97 = vector.broadcast %24 : vector<1x32xf32> to vector<8x32xf32>
    %98 = arith.mulf %96, %97 : vector<8x32xf32>
    %99 = arith.addf %94, %98 : vector<8x32xf32>
    %100 = math.tanh %99 : vector<8x32xf32>
    %cst_41 = arith.constant dense<0.000000e+00> : vector<8x3xf32>
    %101 = tpu.matmul %100, %7, %cst_41 {dimension_numbers = #tpu.dot_dimension_numbers<[1], [0], [0], [1], [0, 0, 1, 1], [], []>} : vector<8x32xf32>, vector<32x3xf32>, vector<8x3xf32> -> vector<8x3xf32>
    %102 = arith.addf %101, %12 : vector<8x3xf32>
    %103 = arith.addf %77, %102 : vector<8x3xf32>
    %c3_i32 = arith.constant 3 : i32
    %c0_42 = arith.constant 0 : index
    %c0_43 = arith.constant 0 : index
    %104 = arith.index_cast %c3_i32 : i32 to index
    %c0_44 = arith.constant 0 : index
    %c0_45 = arith.constant 0 : index
    %105 = vector.load %arg10[%c0_42, %c0_43, %104, %c0_44, %c0_45] : memref<1x1x8x8x3xf32, #tpu.memory_space<vmem>>, vector<1x1x1x8x3xf32>
    %106 = vector.shape_cast %105 : vector<1x1x1x8x3xf32> to vector<8x3xf32>
    %107 = vector.shape_cast %103 : vector<8x3xf32> to vector<1x1x1x8x3xf32>
    tpu.vector_store %arg10[%c0_42, %c0_43, %104, %c0_44, %c0_45], %107 {strides = array<i32>} : memref<1x1x8x8x3xf32, #tpu.memory_space<vmem>>, vector<1x1x1x8x3xf32>,
    %108 = arith.index_cast %c3_i32 : i32 to index
    %c0_46 = arith.constant 0 : index
    %c0_47 = arith.constant 0 : index
    %109 = vector.load %arg12[%108, %c0_46, %c0_47] : memref<8x8x32xf32, #tpu.memory_space<vmem>>, vector<1x8x32xf32>
    %110 = vector.shape_cast %109 : vector<1x8x32xf32> to vector<8x32xf32>
    %111 = vector.extract_strided_slice %103 {offsets = [0, 0], sizes = [8, 1], strides = [1, 1]} : vector<8x3xf32> to vector<8x1xf32>
    %112 = vector.broadcast %111 : vector<8x1xf32> to vector<8x32xf32>
    %113 = vector.broadcast %22 : vector<1x32xf32> to vector<8x32xf32>
    %114 = arith.mulf %112, %113 : vector<8x32xf32>
    %115 = arith.addf %110, %114 : vector<8x32xf32>
    %116 = vector.extract_strided_slice %103 {offsets = [0, 1], sizes = [8, 1], strides = [1, 1]} : vector<8x3xf32> to vector<8x1xf32>
    %117 = vector.broadcast %116 : vector<8x1xf32> to vector<8x32xf32>
    %118 = vector.broadcast %23 : vector<1x32xf32> to vector<8x32xf32>
    %119 = arith.mulf %117, %118 : vector<8x32xf32>
    %120 = arith.addf %115, %119 : vector<8x32xf32>
    %121 = vector.extract_strided_slice %103 {offsets = [0, 2], sizes = [8, 1], strides = [1, 1]} : vector<8x3xf32> to vector<8x1xf32>
    %122 = vector.broadcast %121 : vector<8x1xf32> to vector<8x32xf32>
    %123 = vector.broadcast %24 : vector<1x32xf32> to vector<8x32xf32>
    %124 = arith.mulf %122, %123 : vector<8x32xf32>
    %125 = arith.addf %120, %124 : vector<8x32xf32>
    %126 = math.tanh %125 : vector<8x32xf32>
    %cst_48 = arith.constant dense<0.000000e+00> : vector<8x3xf32>
    %127 = tpu.matmul %126, %7, %cst_48 {dimension_numbers = #tpu.dot_dimension_numbers<[1], [0], [0], [1], [0, 0, 1, 1], [], []>} : vector<8x32xf32>, vector<32x3xf32>, vector<8x3xf32> -> vector<8x3xf32>
    %128 = arith.addf %127, %12 : vector<8x3xf32>
    %129 = arith.addf %103, %128 : vector<8x3xf32>
    %c4_i32 = arith.constant 4 : i32
    %c0_49 = arith.constant 0 : index
    %c0_50 = arith.constant 0 : index
    %130 = arith.index_cast %c4_i32 : i32 to index
    %c0_51 = arith.constant 0 : index
    %c0_52 = arith.constant 0 : index
    %131 = vector.load %arg10[%c0_49, %c0_50, %130, %c0_51, %c0_52] : memref<1x1x8x8x3xf32, #tpu.memory_space<vmem>>, vector<1x1x1x8x3xf32>
    %132 = vector.shape_cast %131 : vector<1x1x1x8x3xf32> to vector<8x3xf32>
    %133 = vector.shape_cast %129 : vector<8x3xf32> to vector<1x1x1x8x3xf32>
    tpu.vector_store %arg10[%c0_49, %c0_50, %130, %c0_51, %c0_52], %133 {strides = array<i32>} : memref<1x1x8x8x3xf32, #tpu.memory_space<vmem>>, vector<1x1x1x8x3xf32>,
    %134 = arith.index_cast %c4_i32 : i32 to index
    %c0_53 = arith.constant 0 : index
    %c0_54 = arith.constant 0 : index
    %135 = vector.load %arg12[%134, %c0_53, %c0_54] : memref<8x8x32xf32, #tpu.memory_space<vmem>>, vector<1x8x32xf32>
    %136 = vector.shape_cast %135 : vector<1x8x32xf32> to vector<8x32xf32>
    %137 = vector.extract_strided_slice %129 {offsets = [0, 0], sizes = [8, 1], strides = [1, 1]} : vector<8x3xf32> to vector<8x1xf32>
    %138 = vector.broadcast %137 : vector<8x1xf32> to vector<8x32xf32>
    %139 = vector.broadcast %22 : vector<1x32xf32> to vector<8x32xf32>
    %140 = arith.mulf %138, %139 : vector<8x32xf32>
    %141 = arith.addf %136, %140 : vector<8x32xf32>
    %142 = vector.extract_strided_slice %129 {offsets = [0, 1], sizes = [8, 1], strides = [1, 1]} : vector<8x3xf32> to vector<8x1xf32>
    %143 = vector.broadcast %142 : vector<8x1xf32> to vector<8x32xf32>
    %144 = vector.broadcast %23 : vector<1x32xf32> to vector<8x32xf32>
    %145 = arith.mulf %143, %144 : vector<8x32xf32>
    %146 = arith.addf %141, %145 : vector<8x32xf32>
    %147 = vector.extract_strided_slice %129 {offsets = [0, 2], sizes = [8, 1], strides = [1, 1]} : vector<8x3xf32> to vector<8x1xf32>
    %148 = vector.broadcast %147 : vector<8x1xf32> to vector<8x32xf32>
    %149 = vector.broadcast %24 : vector<1x32xf32> to vector<8x32xf32>
    %150 = arith.mulf %148, %149 : vector<8x32xf32>
    %151 = arith.addf %146, %150 : vector<8x32xf32>
    %152 = math.tanh %151 : vector<8x32xf32>
    %cst_55 = arith.constant dense<0.000000e+00> : vector<8x3xf32>
    %153 = tpu.matmul %152, %7, %cst_55 {dimension_numbers = #tpu.dot_dimension_numbers<[1], [0], [0], [1], [0, 0, 1, 1], [], []>} : vector<8x32xf32>, vector<32x3xf32>, vector<8x3xf32> -> vector<8x3xf32>
    %154 = arith.addf %153, %12 : vector<8x3xf32>
    %155 = arith.addf %129, %154 : vector<8x3xf32>
    %c5_i32 = arith.constant 5 : i32
    %c0_56 = arith.constant 0 : index
    %c0_57 = arith.constant 0 : index
    %156 = arith.index_cast %c5_i32 : i32 to index
    %c0_58 = arith.constant 0 : index
    %c0_59 = arith.constant 0 : index
    %157 = vector.load %arg10[%c0_56, %c0_57, %156, %c0_58, %c0_59] : memref<1x1x8x8x3xf32, #tpu.memory_space<vmem>>, vector<1x1x1x8x3xf32>
    %158 = vector.shape_cast %157 : vector<1x1x1x8x3xf32> to vector<8x3xf32>
    %159 = vector.shape_cast %155 : vector<8x3xf32> to vector<1x1x1x8x3xf32>
    tpu.vector_store %arg10[%c0_56, %c0_57, %156, %c0_58, %c0_59], %159 {strides = array<i32>} : memref<1x1x8x8x3xf32, #tpu.memory_space<vmem>>, vector<1x1x1x8x3xf32>,
    %160 = arith.index_cast %c5_i32 : i32 to index
    %c0_60 = arith.constant 0 : index
    %c0_61 = arith.constant 0 : index
    %161 = vector.load %arg12[%160, %c0_60, %c0_61] : memref<8x8x32xf32, #tpu.memory_space<vmem>>, vector<1x8x32xf32>
    %162 = vector.shape_cast %161 : vector<1x8x32xf32> to vector<8x32xf32>
    %163 = vector.extract_strided_slice %155 {offsets = [0, 0], sizes = [8, 1], strides = [1, 1]} : vector<8x3xf32> to vector<8x1xf32>
    %164 = vector.broadcast %163 : vector<8x1xf32> to vector<8x32xf32>
    %165 = vector.broadcast %22 : vector<1x32xf32> to vector<8x32xf32>
    %166 = arith.mulf %164, %165 : vector<8x32xf32>
    %167 = arith.addf %162, %166 : vector<8x32xf32>
    %168 = vector.extract_strided_slice %155 {offsets = [0, 1], sizes = [8, 1], strides = [1, 1]} : vector<8x3xf32> to vector<8x1xf32>
    %169 = vector.broadcast %168 : vector<8x1xf32> to vector<8x32xf32>
    %170 = vector.broadcast %23 : vector<1x32xf32> to vector<8x32xf32>
    %171 = arith.mulf %169, %170 : vector<8x32xf32>
    %172 = arith.addf %167, %171 : vector<8x32xf32>
    %173 = vector.extract_strided_slice %155 {offsets = [0, 2], sizes = [8, 1], strides = [1, 1]} : vector<8x3xf32> to vector<8x1xf32>
    %174 = vector.broadcast %173 : vector<8x1xf32> to vector<8x32xf32>
    %175 = vector.broadcast %24 : vector<1x32xf32> to vector<8x32xf32>
    %176 = arith.mulf %174, %175 : vector<8x32xf32>
    %177 = arith.addf %172, %176 : vector<8x32xf32>
    %178 = math.tanh %177 : vector<8x32xf32>
    %cst_62 = arith.constant dense<0.000000e+00> : vector<8x3xf32>
    %179 = tpu.matmul %178, %7, %cst_62 {dimension_numbers = #tpu.dot_dimension_numbers<[1], [0], [0], [1], [0, 0, 1, 1], [], []>} : vector<8x32xf32>, vector<32x3xf32>, vector<8x3xf32> -> vector<8x3xf32>
    %180 = arith.addf %179, %12 : vector<8x3xf32>
    %181 = arith.addf %155, %180 : vector<8x3xf32>
    %c6_i32 = arith.constant 6 : i32
    %c0_63 = arith.constant 0 : index
    %c0_64 = arith.constant 0 : index
    %182 = arith.index_cast %c6_i32 : i32 to index
    %c0_65 = arith.constant 0 : index
    %c0_66 = arith.constant 0 : index
    %183 = vector.load %arg10[%c0_63, %c0_64, %182, %c0_65, %c0_66] : memref<1x1x8x8x3xf32, #tpu.memory_space<vmem>>, vector<1x1x1x8x3xf32>
    %184 = vector.shape_cast %183 : vector<1x1x1x8x3xf32> to vector<8x3xf32>
    %185 = vector.shape_cast %181 : vector<8x3xf32> to vector<1x1x1x8x3xf32>
    tpu.vector_store %arg10[%c0_63, %c0_64, %182, %c0_65, %c0_66], %185 {strides = array<i32>} : memref<1x1x8x8x3xf32, #tpu.memory_space<vmem>>, vector<1x1x1x8x3xf32>,
    %186 = arith.index_cast %c6_i32 : i32 to index
    %c0_67 = arith.constant 0 : index
    %c0_68 = arith.constant 0 : index
    %187 = vector.load %arg12[%186, %c0_67, %c0_68] : memref<8x8x32xf32, #tpu.memory_space<vmem>>, vector<1x8x32xf32>
    %188 = vector.shape_cast %187 : vector<1x8x32xf32> to vector<8x32xf32>
    %189 = vector.extract_strided_slice %181 {offsets = [0, 0], sizes = [8, 1], strides = [1, 1]} : vector<8x3xf32> to vector<8x1xf32>
    %190 = vector.broadcast %189 : vector<8x1xf32> to vector<8x32xf32>
    %191 = vector.broadcast %22 : vector<1x32xf32> to vector<8x32xf32>
    %192 = arith.mulf %190, %191 : vector<8x32xf32>
    %193 = arith.addf %188, %192 : vector<8x32xf32>
    %194 = vector.extract_strided_slice %181 {offsets = [0, 1], sizes = [8, 1], strides = [1, 1]} : vector<8x3xf32> to vector<8x1xf32>
    %195 = vector.broadcast %194 : vector<8x1xf32> to vector<8x32xf32>
    %196 = vector.broadcast %23 : vector<1x32xf32> to vector<8x32xf32>
    %197 = arith.mulf %195, %196 : vector<8x32xf32>
    %198 = arith.addf %193, %197 : vector<8x32xf32>
    %199 = vector.extract_strided_slice %181 {offsets = [0, 2], sizes = [8, 1], strides = [1, 1]} : vector<8x3xf32> to vector<8x1xf32>
    %200 = vector.broadcast %199 : vector<8x1xf32> to vector<8x32xf32>
    %201 = vector.broadcast %24 : vector<1x32xf32> to vector<8x32xf32>
    %202 = arith.mulf %200, %201 : vector<8x32xf32>
    %203 = arith.addf %198, %202 : vector<8x32xf32>
    %204 = math.tanh %203 : vector<8x32xf32>
    %cst_69 = arith.constant dense<0.000000e+00> : vector<8x3xf32>
    %205 = tpu.matmul %204, %7, %cst_69 {dimension_numbers = #tpu.dot_dimension_numbers<[1], [0], [0], [1], [0, 0, 1, 1], [], []>} : vector<8x32xf32>, vector<32x3xf32>, vector<8x3xf32> -> vector<8x3xf32>
    %206 = arith.addf %205, %12 : vector<8x3xf32>
    %207 = arith.addf %181, %206 : vector<8x3xf32>
    %c7_i32 = arith.constant 7 : i32
    %c0_70 = arith.constant 0 : index
    %c0_71 = arith.constant 0 : index
    %208 = arith.index_cast %c7_i32 : i32 to index
    %c0_72 = arith.constant 0 : index
    %c0_73 = arith.constant 0 : index
    %209 = vector.load %arg10[%c0_70, %c0_71, %208, %c0_72, %c0_73] : memref<1x1x8x8x3xf32, #tpu.memory_space<vmem>>, vector<1x1x1x8x3xf32>
    %210 = vector.shape_cast %209 : vector<1x1x1x8x3xf32> to vector<8x3xf32>
    %211 = vector.shape_cast %207 : vector<8x3xf32> to vector<1x1x1x8x3xf32>
    tpu.vector_store %arg10[%c0_70, %c0_71, %208, %c0_72, %c0_73], %211 {strides = array<i32>} : memref<1x1x8x8x3xf32, #tpu.memory_space<vmem>>, vector<1x1x1x8x3xf32>,
    %212 = arith.index_cast %c7_i32 : i32 to index
    %c0_74 = arith.constant 0 : index
    %c0_75 = arith.constant 0 : index
    %213 = vector.load %arg12[%212, %c0_74, %c0_75] : memref<8x8x32xf32, #tpu.memory_space<vmem>>, vector<1x8x32xf32>
    %214 = vector.shape_cast %213 : vector<1x8x32xf32> to vector<8x32xf32>
    %215 = vector.extract_strided_slice %207 {offsets = [0, 0], sizes = [8, 1], strides = [1, 1]} : vector<8x3xf32> to vector<8x1xf32>
    %216 = vector.broadcast %215 : vector<8x1xf32> to vector<8x32xf32>
    %217 = vector.broadcast %22 : vector<1x32xf32> to vector<8x32xf32>
    %218 = arith.mulf %216, %217 : vector<8x32xf32>
    %219 = arith.addf %214, %218 : vector<8x32xf32>
    %220 = vector.extract_strided_slice %207 {offsets = [0, 1], sizes = [8, 1], strides = [1, 1]} : vector<8x3xf32> to vector<8x1xf32>
    %221 = vector.broadcast %220 : vector<8x1xf32> to vector<8x32xf32>
    %222 = vector.broadcast %23 : vector<1x32xf32> to vector<8x32xf32>
    %223 = arith.mulf %221, %222 : vector<8x32xf32>
    %224 = arith.addf %219, %223 : vector<8x32xf32>
    %225 = vector.extract_strided_slice %207 {offsets = [0, 2], sizes = [8, 1], strides = [1, 1]} : vector<8x3xf32> to vector<8x1xf32>
    %226 = vector.broadcast %225 : vector<8x1xf32> to vector<8x32xf32>
    %227 = vector.broadcast %24 : vector<1x32xf32> to vector<8x32xf32>
    %228 = arith.mulf %226, %227 : vector<8x32xf32>
    %229 = arith.addf %224, %228 : vector<8x32xf32>
    %230 = math.tanh %229 : vector<8x32xf32>
    %cst_76 = arith.constant dense<0.000000e+00> : vector<8x3xf32>
    %231 = tpu.matmul %230, %7, %cst_76 {dimension_numbers = #tpu.dot_dimension_numbers<[1], [0], [0], [1], [0, 0, 1, 1], [], []>} : vector<8x32xf32>, vector<32x3xf32>, vector<8x3xf32> -> vector<8x3xf32>
    %232 = arith.addf %231, %12 : vector<8x3xf32>
    %233 = arith.addf %207, %232 : vector<8x3xf32>
    %c8_i32 = arith.constant 8 : i32
    %c0_77 = arith.constant 0 : index
    %c0_78 = arith.constant 0 : index
    %234 = vector.load %arg11[%c0_77, %c0_78] : memref<8x3xf32, #tpu.memory_space<vmem>>, vector<8x3xf32>
    tpu.vector_store %arg11[%c0_77, %c0_78], %233 {strides = array<i32>} : memref<8x3xf32, #tpu.memory_space<vmem>>, vector<8x3xf32>,
    return
  }
  func.func @transform_0(%arg0: i32, %arg1: i32) -> i32 {
    %c0_i32 = arith.constant 0 : i32
    %c0_i32_0 = arith.constant 0 : i32
    return %c0_i32 : i32
  }
  func.func @transform_1(%arg0: i32, %arg1: i32) -> (i32, i32, i32) {
    %c0_i32 = arith.constant 0 : i32
    %c0_i32_0 = arith.constant 0 : i32
    %c0_i32_1 = arith.constant 0 : i32
    return %arg0, %c0_i32, %c0_i32_0 : i32, i32, i32
  }
  func.func @transform_2(%arg0: i32, %arg1: i32) -> (i32, i32, i32, i32) {
    %c0_i32 = arith.constant 0 : i32
    %c0_i32_0 = arith.constant 0 : i32
    %c0_i32_1 = arith.constant 0 : i32
    return %arg0, %arg1, %c0_i32, %c0_i32_0 : i32, i32, i32, i32
  }
  func.func @transform_3(%arg0: i32, %arg1: i32) -> (i32, i32) {
    %c0_i32 = arith.constant 0 : i32
    %c0_i32_0 = arith.constant 0 : i32
    %c0_i32_1 = arith.constant 0 : i32
    return %c0_i32, %c0_i32_0 : i32, i32
  }
  func.func @transform_4(%arg0: i32, %arg1: i32) -> (i32, i32) {
    %c0_i32 = arith.constant 0 : i32
    %c0_i32_0 = arith.constant 0 : i32
    %c0_i32_1 = arith.constant 0 : i32
    return %c0_i32, %c0_i32_0 : i32, i32
  }
  func.func @transform_5(%arg0: i32, %arg1: i32) -> (i32, i32) {
    %c0_i32 = arith.constant 0 : i32
    %c0_i32_0 = arith.constant 0 : i32
    %c0_i32_1 = arith.constant 0 : i32
    return %c0_i32, %c0_i32_0 : i32, i32
  }
  func.func @transform_6(%arg0: i32, %arg1: i32) -> (i32, i32) {
    %c0_i32 = arith.constant 0 : i32
    %c0_i32_0 = arith.constant 0 : i32
    %c0_i32_1 = arith.constant 0 : i32
    return %c0_i32, %c0_i32_0 : i32, i32
  }
  func.func @transform_7(%arg0: i32, %arg1: i32) -> (i32, i32) {
    %c0_i32 = arith.constant 0 : i32
    %c0_i32_0 = arith.constant 0 : i32
    %c0_i32_1 = arith.constant 0 : i32
    return %c0_i32, %c0_i32_0 : i32, i32
  }
  func.func @transform_8(%arg0: i32, %arg1: i32) -> (i32, i32, i32, i32, i32) {
    %c0_i32 = arith.constant 0 : i32
    %c0_i32_0 = arith.constant 0 : i32
    %c0_i32_1 = arith.constant 0 : i32
    %c0_i32_2 = arith.constant 0 : i32
    return %arg1, %arg0, %c0_i32, %c0_i32_0, %c0_i32_1 : i32, i32, i32, i32, i32
  }
}

</mosaic_0001>

<llo_original>
// kernel: tpu_custom_call.1
$region0: #{tpu_custom_call.1}
  #allocation0 [shape = 'u32[]', space=smem, size = 0x4, offset = 0x4, fixed_abs, tag = 'smem constant byte address 0x4 - core index']
  #allocation1 [shape = 'u32[144,128]{1,0:T(1,128)}', space=vmem, size = 0x12000, scoped, tag = 'internal scratch']
  #allocation2 [shape = 'f32[8,3]{1,0:T(8,128)}', space=vmem, size = 0x1000, scoped, tag = 'scratch operand']
  #allocation3 [shape = 'f32[8,8,32]{2,1,0:T(8,128)}', space=vmem, size = 0x8000, scoped, tag = 'scratch operand']
  #allocation4 [shape = 'f32[1]{0:T(128)S(6)}', space=smem, size = 0x200, scoped, tag = 'scoped memory for tpu_custom_call.1']
  %s0 = inlined_call_operand.<no memory space> [shape: f32[1], index: 0, kind: input, shape index: {}]
  %s1 = inlined_call_operand.vmem [shape: f32[1,8,3], index: 1, kind: input, shape index: {}]
  %s2 = inlined_call_operand.vmem [shape: f32[1,1,64,2], index: 2, kind: input, shape index: {}]
  %s3 = inlined_call_operand.vmem [shape: f32[3,32], index: 3, kind: input, shape index: {}]
  %s4 = inlined_call_operand.vmem [shape: f32[2,32], index: 4, kind: input, shape index: {}]
  %s5 = inlined_call_operand.vmem [shape: f32[1,32], index: 5, kind: input, shape index: {}]
  %s6 = inlined_call_operand.vmem [shape: f32[32,3], index: 6, kind: input, shape index: {}]
  %s7 = inlined_call_operand.vmem [shape: f32[1,3], index: 7, kind: input, shape index: {}]
  %s8 = inlined_call_operand.vmem [shape: f32[1,1,8,8,3], index: 8, kind: output, shape index: {}]
  %s9 = sld [smem:[#allocation0]]
  $region46: #{tpu_custom_call.1} parent=0
    _
  %s11 = ssub.s32 1, %s9
  %s12 = scalar_select 0, %s11, %s9
  %13 = sst [smem:[#allocation4]] %s0
  // Predicated region
  $region2: #{tpu_custom_call.1} parent=0 // pred_check
    _
  $region3: #{tpu_custom_call.1} parent=0 // pred_check_branch
    %15 = sbr.rel (0) target = $region5
  $region4: #{tpu_custom_call.1} parent=0 // pred_region
    _
  $region5: #{tpu_custom_call.1} parent=0 // pred_fallthru
    _
  // Predicated region
  $region6: #{tpu_custom_call.1} parent=0 // pred_check
    _
  $region7: #{tpu_custom_call.1} parent=0 // pred_check_branch
    %17 = sbr.rel (0) target = $region9
  $region8: #{tpu_custom_call.1} parent=0 // pred_region
    _
  $region9: #{tpu_custom_call.1} parent=0 // pred_fallthru
    _
  // Predicated region
  $region10: #{tpu_custom_call.1} parent=0 // pred_check
    _
  $region11: #{tpu_custom_call.1} parent=0 // pred_check_branch
    %19 = sbr.rel (0) target = $region13
  $region12: #{tpu_custom_call.1} parent=0 // pred_region
    _
  $region13: #{tpu_custom_call.1} parent=0 // pred_fallthru
    _
  // Predicated region
  $region14: #{tpu_custom_call.1} parent=0 // pred_check
    _
  $region15: #{tpu_custom_call.1} parent=0 // pred_check_branch
    %21 = sbr.rel (0) target = $region17
  $region16: #{tpu_custom_call.1} parent=0 // pred_region
    _
  $region17: #{tpu_custom_call.1} parent=0 // pred_fallthru
    _
  // Predicated region
  $region18: #{tpu_custom_call.1} parent=0 // pred_check
    _
  $region19: #{tpu_custom_call.1} parent=0 // pred_check_branch
    %23 = sbr.rel (0) target = $region21
  $region20: #{tpu_custom_call.1} parent=0 // pred_region
    _
  $region21: #{tpu_custom_call.1} parent=0 // pred_fallthru
    _
  // Predicated region
  $region22: #{tpu_custom_call.1} parent=0 // pred_check
    _
  $region23: #{tpu_custom_call.1} parent=0 // pred_check_branch
    %25 = sbr.rel (0) target = $region25
  $region24: #{tpu_custom_call.1} parent=0 // pred_region
    _
  $region25: #{tpu_custom_call.1} parent=0 // pred_fallthru
    _
  // Predicated region
  $region26: #{tpu_custom_call.1} parent=0 // pred_check
    _
  $region27: #{tpu_custom_call.1} parent=0 // pred_check_branch
    %27 = sbr.rel (0) target = $region29
  $region28: #{tpu_custom_call.1} parent=0 // pred_region
    _
  $region29: #{tpu_custom_call.1} parent=0 // pred_fallthru
    _
  // Predicated region
  $region30: #{tpu_custom_call.1} parent=0 // pred_check
    _
  $region31: #{tpu_custom_call.1} parent=0 // pred_check_branch
    %29 = sbr.rel (0) target = $region33
  $region32: #{tpu_custom_call.1} parent=0 // pred_region
    _
  $region33: #{tpu_custom_call.1} parent=0 // pred_fallthru
    _
  %p30 = scmp.eq.s32.totalorder 0, 0
  // Predicated region
  $region34: #{tpu_custom_call.1} parent=0 // pred_check
    %p31 = pneg %p30
  $region35: #{tpu_custom_call.1} parent=0 // pred_check_branch
    %33 = sbr.rel (%p31) target = $region37
  $region36: #{tpu_custom_call.1} parent=0 // pred_region
    %v34 = vld [vmem:[%s1] sm:$0xff]
    %vm35 = vcmask 23552
    %36 = vst.msk [vmem:[#allocation2] sm:$0xff] %vm35, %v34
  $region37: #{tpu_custom_call.1} parent=0 // pred_fallthru
    _
  %s37 = sld [smem:[#allocation4]]
  %v38 = vld [vmem:[%s3] sm:$0x7]
  %v39 = vld [vmem:[%s6] sm:$0xff]
  %v40 = vld [vmem:[%s6 + $0x8] sm:$0xff]
  %v41 = vld [vmem:[%s6 + $0x10] sm:$0xff]
  %v42 = vld [vmem:[%s6 + $0x18] sm:$0xff]
  %v43 = vstv %s37
  %v44 = vmul.f32 %v43, %v39
  %v45 = vmul.f32 %v43, %v40
  %v46 = vmul.f32 %v43, %v41
  %v47 = vmul.f32 %v43, %v42
  %v48 = vld [vmem:[%s7] sm:$0x1]
  %v49 = vmul.f32 %v43, %v48
  %v51 = vlaneseq
  %v52 = vshrl.u32 %v51, 7
  %v53 = vsub.s32 0, %v52
  %v54 = vrot.slane %v49, %v53
  %v56 = vld [vmem:[%s2] sm:$0xff]
  %v57 = vld [vmem:[%s2 + $0x8] sm:$0xff]
  %v58 = vld [vmem:[%s2 + $0x10] sm:$0xff]
  %v59 = vld [vmem:[%s2 + $0x18] sm:$0xff]
  %v60 = vld [vmem:[%s2 + $0x20] sm:$0xff]
  %v61 = vld [vmem:[%s2 + $0x28] sm:$0xff]
  %v62 = vld [vmem:[%s2 + $0x30] sm:$0xff]
  %v63 = vld [vmem:[%s2 + $0x38] sm:$0xff]
  %v64 = vld [vmem:[%s4] sm:$0x3]
  %v65 = vld [vmem:[%s5] sm:$0x1]
  %v67 = vlaneseq
  %v68 = vshrl.u32 %v67, 7
  %v69 = vsub.s32 0, %v68
  %v70 = vrot.slane %v65, %v69
  %vm72 = vcmask 15360
  %v74 = vsel %vm72, %v56, 0
  %v77 = vsel %vm72, %v57, 0
  %v80 = vsel %vm72, %v58, 0
  %v83 = vsel %vm72, %v59, 0
  %v86 = vsel %vm72, %v60, 0
  %v89 = vsel %vm72, %v61, 0
  %v92 = vsel %vm72, %v62, 0
  %v95 = vsel %vm72, %v63, 0
  %vm97 = vcmask 1041408
  %v99 = vsel %vm97, %v64, 0
  %101 = vmatprep.subr.mxu0 0.0
  %102 = vmatpush1.msra.mxu0 %v99
  %103 = vmatprep.subr.mxu0 0.0
  %104 = vmatpush1.msra.mxu0 0.0
  %105 = vmatprep.subr.mxu0 0.0
  %106 = vmatpush1.msra.mxu0 0.0
  %107 = vmatprep.subr.mxu0 0.0
  %108 = vmatpush1.msra.mxu0 0.0
  %109 = vmatprep.subr.mxu0 0.0
  %110 = vmatpush1.msra.mxu0 0.0
  %111 = vmatprep.subr.mxu0 0.0
  %112 = vmatpush1.msra.mxu0 0.0
  %113 = vmatprep.subr.mxu0 0.0
  %114 = vmatpush1.msra.mxu0 0.0
  %115 = vmatprep.subr.mxu0 0.0
  %116 = vmatpush1.msra.mxu0 0.0
  %117 = vmatprep.subr.mxu0 0.0
  %118 = vmatpush1.msra.mxu0 0.0
  %119 = vmatprep.subr.mxu0 0.0
  %120 = vmatpush1.msra.mxu0 0.0
  %121 = vmatprep.subr.mxu0 0.0
  %122 = vmatpush1.msra.mxu0 0.0
  %123 = vmatprep.subr.mxu0 0.0
  %124 = vmatpush1.msra.mxu0 0.0
  %125 = vmatprep.subr.mxu0 0.0
  %126 = vmatpush1.msra.mxu0 0.0
  %127 = vmatprep.subr.mxu0 0.0
  %128 = vmatpush1.msra.mxu0 0.0
  %129 = vmatprep.subr.mxu0 0.0
  %130 = vmatpush1.msra.mxu0 0.0
  %131 = vmatprep.subr.mxu0 0.0
  %132 = vmatpush1.msra.mxu0 0.0
  %133 = vmatprep.subr.mxu0 0.0
  %134 = vmatpush1.msra.mxu0 0.0
  %135 = vmatprep.subr.mxu0 0.0
  %136 = vmatpush1.msra.mxu0 0.0
  %137 = vmatprep.subr.mxu0 0.0
  %138 = vmatpush1.msra.mxu0 0.0
  %139 = vmatprep.subr.mxu0 0.0
  %140 = vmatpush1.msra.mxu0 0.0
  %141 = vmatprep.subr.mxu0 0.0
  %142 = vmatpush1.msra.mxu0 0.0
  %143 = vmatprep.subr.mxu0 0.0
  %144 = vmatpush1.msra.mxu0 0.0
  %145 = vmatprep.subr.mxu0 0.0
  %146 = vmatpush1.msra.mxu0 0.0
  %147 = vmatprep.subr.mxu0 0.0
  %148 = vmatpush1.msra.mxu0 0.0
  %149 = vmatprep.subr.mxu0 0.0
  %150 = vmatpush1.msra.mxu0 0.0
  %151 = vmatprep.subr.mxu0 0.0
  %152 = vmatpush1.msra.mxu0 0.0
  %153 = vmatprep.subr.mxu0 0.0
  %154 = vmatpush1.msra.mxu0 0.0
  %155 = vmatprep.subr.mxu0 0.0
  %156 = vmatpush1.msra.mxu0 0.0
  %157 = vmatprep.subr.mxu0 0.0
  %158 = vmatpush1.msra.mxu0 0.0
  %159 = vmatprep.subr.mxu0 0.0
  %160 = vmatpush1.msra.mxu0 0.0
  %161 = vmatprep.subr.mxu0 0.0
  %162 = vmatpush1.msra.mxu0 0.0
  %163 = vmatprep.subr.mxu0 0.0
  %164 = vmatpush1.msra.mxu0 0.0
  %165 = vmatprep.mubr.f32.mxu0 0.0
  %166 = vmatmul.mubr.f32.gmra.mrb[0].mxu0 %v74
  %v167 = vpop.f32.mrb[0].mxu0
  %v168 = vadd.f32 %v70, %v167
  %v169 = vpop.f32.mrb[0].mxu0
  %170 = vmatprep.mubr.f32.mxu0 0.0
  %171 = vmatmul.mubr.f32.gmra.mrb[0].mxu0 %v77
  %v172 = vpop.f32.mrb[0].mxu0
  %v173 = vadd.f32 %v70, %v172
  %v174 = vpop.f32.mrb[0].mxu0
  %175 = vmatprep.mubr.f32.mxu0 0.0
  %176 = vmatmul.mubr.f32.gmra.mrb[0].mxu0 %v80
  %v177 = vpop.f32.mrb[0].mxu0
  %v178 = vadd.f32 %v70, %v177
  %v179 = vpop.f32.mrb[0].mxu0
  %180 = vmatprep.mubr.f32.mxu0 0.0
  %181 = vmatmul.mubr.f32.gmra.mrb[0].mxu0 %v83
  %v182 = vpop.f32.mrb[0].mxu0
  %v183 = vadd.f32 %v70, %v182
  %v184 = vpop.f32.mrb[0].mxu0
  %185 = vmatprep.mubr.f32.mxu0 0.0
  %186 = vmatmul.mubr.f32.gmra.mrb[0].mxu0 %v86
  %v187 = vpop.f32.mrb[0].mxu0
  %v188 = vadd.f32 %v70, %v187
  %v189 = vpop.f32.mrb[0].mxu0
  %190 = vmatprep.mubr.f32.mxu0 0.0
  %191 = vmatmul.mubr.f32.gmra.mrb[0].mxu0 %v89
  %v192 = vpop.f32.mrb[0].mxu0
  %v193 = vadd.f32 %v70, %v192
  %v194 = vpop.f32.mrb[0].mxu0
  %195 = vmatprep.mubr.f32.mxu0 0.0
  %196 = vmatmul.mubr.f32.gmra.mrb[0].mxu0 %v92
  %v197 = vpop.f32.mrb[0].mxu0
  %v198 = vadd.f32 %v70, %v197
  %v199 = vpop.f32.mrb[0].mxu0
  %200 = vmatprep.mubr.f32.mxu0 0.0
  %201 = vmatmul.mubr.f32.gmra.mrb[0].mxu0 %v95
  %v202 = vpop.f32.mrb[0].mxu0
  %v203 = vadd.f32 %v70, %v202
  %v204 = vpop.f32.mrb[0].mxu0
  %205 = vdwg.mxu0
  %vm206 = vcmask 261120
  %207 = vst.msk [vmem:[#allocation3] sm:$0xff] %vm206, %v168
  %208 = vst.msk [vmem:[#allocation3 + $0x8] sm:$0xff] %vm206, %v173
  %209 = vst.msk [vmem:[#allocation3 + $0x10] sm:$0xff] %vm206, %v178
  %210 = vst.msk [vmem:[#allocation3 + $0x18] sm:$0xff] %vm206, %v183
  %211 = vst.msk [vmem:[#allocation3 + $0x20] sm:$0xff] %vm206, %v188
  %212 = vst.msk [vmem:[#allocation3 + $0x28] sm:$0xff] %vm206, %v193
  %213 = vst.msk [vmem:[#allocation3 + $0x30] sm:$0xff] %vm206, %v198
  %214 = vst.msk [vmem:[#allocation3 + $0x38] sm:$0xff] %vm206, %v203
  %v215 = vld [vmem:[#allocation2] sm:$0xff]
  %vm216 = vcmask 23552
  %217 = vst.msk [vmem:[%s8] sm:$0xff] %vm216, %v215
  %v218 = vld [vmem:[#allocation3] sm:$0xff]
  %220 = vset.pattern.permute.xlu0 0
  %221 = vperm.xlu0 %220, %v215
  %v222 = vpop.permute.xlu0 %221
  %v224 = vlaneseq
  %v225 = vshrl.u32 %v224, 7
  %v226 = vsub.s32 0, %v225
  %v227 = vrot.slane %v38, %v226
  %v228 = vmul.f32 %v222, %v227
  %v229 = vadd.f32 %v218, %v228
  %230 = vset.pattern.permute.xlu0 1
  %231 = vperm.xlu0 %230, %v215
  %v232 = vpop.permute.xlu0 %231
  %v234 = vlaneseq
  %v235 = vshrl.u32 %v234, 7
  %v236 = vsub.s32 1, %v235
  %v237 = vrot.slane %v38, %v236
  %v238 = vmul.f32 %v232, %v237
  %v239 = vadd.f32 %v229, %v238
  %240 = vset.pattern.permute.xlu0 2
  %241 = vperm.xlu0 %240, %v215
  %v242 = vpop.permute.xlu0 %241
  %v244 = vlaneseq
  %v245 = vshrl.u32 %v244, 7
  %v246 = vsub.s32 2, %v245
  %v247 = vrot.slane %v38, %v246
  %v248 = vmul.f32 %v242, %v247
  %v249 = vadd.f32 %v239, %v248
  %v250 = vtanh.pop %v249
  %v252 = vsel %vm206, %v250, 0
  %254 = vmatprep.subr.mxu0 0.0
  %255 = vmatpush1.msra.mxu0 %v44
  %256 = vmatprep.subr.mxu0 0.0
  %257 = vmatpush1.msra.mxu0 %v45
  %258 = vmatprep.subr.mxu0 0.0
  %259 = vmatpush1.msra.mxu0 %v46
  %260 = vmatprep.subr.mxu0 0.0
  %261 = vmatpush1.msra.mxu0 %v47
  %262 = vmatprep.subr.mxu0 0.0
  %263 = vmatpush1.msra.mxu0 0.0
  %264 = vmatprep.subr.mxu0 0.0
  %265 = vmatpush1.msra.mxu0 0.0
  %266 = vmatprep.subr.mxu0 0.0
  %267 = vmatpush1.msra.mxu0 0.0
  %268 = vmatprep.subr.mxu0 0.0
  %269 = vmatpush1.msra.mxu0 0.0
  %270 = vmatprep.subr.mxu0 0.0
  %271 = vmatpush1.msra.mxu0 0.0
  %272 = vmatprep.subr.mxu0 0.0
  %273 = vmatpush1.msra.mxu0 0.0
  %274 = vmatprep.subr.mxu0 0.0
  %275 = vmatpush1.msra.mxu0 0.0
  %276 = vmatprep.subr.mxu0 0.0
  %277 = vmatpush1.msra.mxu0 0.0
  %278 = vmatprep.subr.mxu0 0.0
  %279 = vmatpush1.msra.mxu0 0.0
  %280 = vmatprep.subr.mxu0 0.0
  %281 = vmatpush1.msra.mxu0 0.0
  %282 = vmatprep.subr.mxu0 0.0
  %283 = vmatpush1.msra.mxu0 0.0
  %284 = vmatprep.subr.mxu0 0.0
  %285 = vmatpush1.msra.mxu0 0.0
  %286 = vmatprep.subr.mxu0 0.0
  %287 = vmatpush1.msra.mxu0 0.0
  %288 = vmatprep.subr.mxu0 0.0
  %289 = vmatpush1.msra.mxu0 0.0
  %290 = vmatprep.subr.mxu0 0.0
  %291 = vmatpush1.msra.mxu0 0.0
  %292 = vmatprep.subr.mxu0 0.0
  %293 = vmatpush1.msra.mxu0 0.0
  %294 = vmatprep.subr.mxu0 0.0
  %295 = vmatpush1.msra.mxu0 0.0
  %296 = vmatprep.subr.mxu0 0.0
  %297 = vmatpush1.msra.mxu0 0.0
  %298 = vmatprep.subr.mxu0 0.0
  %299 = vmatpush1.msra.mxu0 0.0
  %300 = vmatprep.subr.mxu0 0.0
  %301 = vmatpush1.msra.mxu0 0.0
  %302 = vmatprep.subr.mxu0 0.0
  %303 = vmatpush1.msra.mxu0 0.0
  %304 = vmatprep.subr.mxu0 0.0
  %305 = vmatpush1.msra.mxu0 0.0
  %306 = vmatprep.subr.mxu0 0.0
  %307 = vmatpush1.msra.mxu0 0.0
  %308 = vmatprep.subr.mxu0 0.0
  %309 = vmatpush1.msra.mxu0 0.0
  %310 = vmatprep.subr.mxu0 0.0
  %311 = vmatpush1.msra.mxu0 0.0
  %312 = vmatprep.subr.mxu0 0.0
  %313 = vmatpush1.msra.mxu0 0.0
  %314 = vmatprep.subr.mxu0 0.0
  %315 = vmatpush1.msra.mxu0 0.0
  %316 = vmatprep.subr.mxu0 0.0
  %317 = vmatpush1.msra.mxu0 0.0
  %318 = vmatprep.mubr.f32.mxu0 0.0
  %319 = vmatmul.mubr.f32.gmra.mrb[0].mxu0 %v252
  %v320 = vpop.f32.mrb[0].mxu0
  %v321 = vadd.f32 %v54, %v320
  %v322 = vpop.f32.mrb[0].mxu0
  %323 = vdwg.mxu0
  %v324 = vadd.f32 %v215, %v321
  %s325 = scalar_lea.vmem %s8, 8
  %326 = vst.msk [vmem:[%s325] sm:$0xff] %vm216, %v324
  %s327 = scalar_lea.vmem [#allocation3], 8
  %v328 = vld [vmem:[%s327] sm:$0xff]
  %330 = vset.pattern.permute.xlu0 0
  %331 = vperm.xlu0 %330, %v324
  %v332 = vpop.permute.xlu0 %331
  %v334 = vmul.f32 %v332, %v227
  %v335 = vadd.f32 %v328, %v334
  %336 = vset.pattern.permute.xlu0 1
  %337 = vperm.xlu0 %336, %v324
  %v338 = vpop.permute.xlu0 %337
  %v340 = vmul.f32 %v338, %v237
  %v341 = vadd.f32 %v335, %v340
  %342 = vset.pattern.permute.xlu0 2
  %343 = vperm.xlu0 %342, %v324
  %v344 = vpop.permute.xlu0 %343
  %v346 = vmul.f32 %v344, %v247
  %v347 = vadd.f32 %v341, %v346
  %v348 = vtanh.pop %v347
  %v350 = vsel %vm206, %v348, 0
  %352 = vmatprep.subr.mxu0 0.0
  %353 = vmatpush1.msra.mxu0 %v44
  %354 = vmatprep.subr.mxu0 0.0
  %355 = vmatpush1.msra.mxu0 %v45
  %356 = vmatprep.subr.mxu0 0.0
  %357 = vmatpush1.msra.mxu0 %v46
  %358 = vmatprep.subr.mxu0 0.0
  %359 = vmatpush1.msra.mxu0 %v47
  %360 = vmatprep.subr.mxu0 0.0
  %361 = vmatpush1.msra.mxu0 0.0
  %362 = vmatprep.subr.mxu0 0.0
  %363 = vmatpush1.msra.mxu0 0.0
  %364 = vmatprep.subr.mxu0 0.0
  %365 = vmatpush1.msra.mxu0 0.0
  %366 = vmatprep.subr.mxu0 0.0
  %367 = vmatpush1.msra.mxu0 0.0
  %368 = vmatprep.subr.mxu0 0.0
  %369 = vmatpush1.msra.mxu0 0.0
  %370 = vmatprep.subr.mxu0 0.0
  %371 = vmatpush1.msra.mxu0 0.0
  %372 = vmatprep.subr.mxu0 0.0
  %373 = vmatpush1.msra.mxu0 0.0
  %374 = vmatprep.subr.mxu0 0.0
  %375 = vmatpush1.msra.mxu0 0.0
  %376 = vmatprep.subr.mxu0 0.0
  %377 = vmatpush1.msra.mxu0 0.0
  %378 = vmatprep.subr.mxu0 0.0
  %379 = vmatpush1.msra.mxu0 0.0
  %380 = vmatprep.subr.mxu0 0.0
  %381 = vmatpush1.msra.mxu0 0.0
  %382 = vmatprep.subr.mxu0 0.0
  %383 = vmatpush1.msra.mxu0 0.0
  %384 = vmatprep.subr.mxu0 0.0
  %385 = vmatpush1.msra.mxu0 0.0
  %386 = vmatprep.subr.mxu0 0.0
  %387 = vmatpush1.msra.mxu0 0.0
  %388 = vmatprep.subr.mxu0 0.0
  %389 = vmatpush1.msra.mxu0 0.0
  %390 = vmatprep.subr.mxu0 0.0
  %391 = vmatpush1.msra.mxu0 0.0
  %392 = vmatprep.subr.mxu0 0.0
  %393 = vmatpush1.msra.mxu0 0.0
  %394 = vmatprep.subr.mxu0 0.0
  %395 = vmatpush1.msra.mxu0 0.0
  %396 = vmatprep.subr.mxu0 0.0
  %397 = vmatpush1.msra.mxu0 0.0
  %398 = vmatprep.subr.mxu0 0.0
  %399 = vmatpush1.msra.mxu0 0.0
  %400 = vmatprep.subr.mxu0 0.0
  %401 = vmatpush1.msra.mxu0 0.0
  %402 = vmatprep.subr.mxu0 0.0
  %403 = vmatpush1.msra.mxu0 0.0
  %404 = vmatprep.subr.mxu0 0.0
  %405 = vmatpush1.msra.mxu0 0.0
  %406 = vmatprep.subr.mxu0 0.0
  %407 = vmatpush1.msra.mxu0 0.0
  %408 = vmatprep.subr.mxu0 0.0
  %409 = vmatpush1.msra.mxu0 0.0
  %410 = vmatprep.subr.mxu0 0.0
  %411 = vmatpush1.msra.mxu0 0.0
  %412 = vmatprep.subr.mxu0 0.0
  %413 = vmatpush1.msra.mxu0 0.0
  %414 = vmatprep.subr.mxu0 0.0
  %415 = vmatpush1.msra.mxu0 0.0
  %416 = vmatprep.mubr.f32.mxu0 0.0
  %417 = vmatmul.mubr.f32.gmra.mrb[0].mxu0 %v350
  %v418 = vpop.f32.mrb[0].mxu0
  %v419 = vadd.f32 %v54, %v418
  %v420 = vpop.f32.mrb[0].mxu0
  %421 = vdwg.mxu0
  %v422 = vadd.f32 %v324, %v419
  %s423 = scalar_lea.vmem %s8, 16
  %424 = vst.msk [vmem:[%s423] sm:$0xff] %vm216, %v422
  %s425 = scalar_lea.vmem [#allocation3], 16
  %v426 = vld [vmem:[%s425] sm:$0xff]
  %428 = vset.pattern.permute.xlu0 0
  %429 = vperm.xlu0 %428, %v422
  %v430 = vpop.permute.xlu0 %429
  %v432 = vmul.f32 %v430, %v227
  %v433 = vadd.f32 %v426, %v432
  %434 = vset.pattern.permute.xlu0 1
  %435 = vperm.xlu0 %434, %v422
  %v436 = vpop.permute.xlu0 %435
  %v438 = vmul.f32 %v436, %v237
  %v439 = vadd.f32 %v433, %v438
  %440 = vset.pattern.permute.xlu0 2
  %441 = vperm.xlu0 %440, %v422
  %v442 = vpop.permute.xlu0 %441
  %v444 = vmul.f32 %v442, %v247
  %v445 = vadd.f32 %v439, %v444
  %v446 = vtanh.pop %v445
  %v448 = vsel %vm206, %v446, 0
  %450 = vmatprep.subr.mxu0 0.0
  %451 = vmatpush1.msra.mxu0 %v44
  %452 = vmatprep.subr.mxu0 0.0
  %453 = vmatpush1.msra.mxu0 %v45
  %454 = vmatprep.subr.mxu0 0.0
  %455 = vmatpush1.msra.mxu0 %v46
  %456 = vmatprep.subr.mxu0 0.0
  %457 = vmatpush1.msra.mxu0 %v47
  %458 = vmatprep.subr.mxu0 0.0
  %459 = vmatpush1.msra.mxu0 0.0
  %460 = vmatprep.subr.mxu0 0.0
  %461 = vmatpush1.msra.mxu0 0.0
  %462 = vmatprep.subr.mxu0 0.0
  %463 = vmatpush1.msra.mxu0 0.0
  %464 = vmatprep.subr.mxu0 0.0
  %465 = vmatpush1.msra.mxu0 0.0
  %466 = vmatprep.subr.mxu0 0.0
  %467 = vmatpush1.msra.mxu0 0.0
  %468 = vmatprep.subr.mxu0 0.0
  %469 = vmatpush1.msra.mxu0 0.0
  %470 = vmatprep.subr.mxu0 0.0
  %471 = vmatpush1.msra.mxu0 0.0
  %472 = vmatprep.subr.mxu0 0.0
  %473 = vmatpush1.msra.mxu0 0.0
  %474 = vmatprep.subr.mxu0 0.0
  %475 = vmatpush1.msra.mxu0 0.0
  %476 = vmatprep.subr.mxu0 0.0
  %477 = vmatpush1.msra.mxu0 0.0
  %478 = vmatprep.subr.mxu0 0.0
  %479 = vmatpush1.msra.mxu0 0.0
  %480 = vmatprep.subr.mxu0 0.0
  %481 = vmatpush1.msra.mxu0 0.0
  %482 = vmatprep.subr.mxu0 0.0
  %483 = vmatpush1.msra.mxu0 0.0
  %484 = vmatprep.subr.mxu0 0.0
  %485 = vmatpush1.msra.mxu0 0.0
  %486 = vmatprep.subr.mxu0 0.0
  %487 = vmatpush1.msra.mxu0 0.0
  %488 = vmatprep.subr.mxu0 0.0
  %489 = vmatpush1.msra.mxu0 0.0
  %490 = vmatprep.subr.mxu0 0.0
  %491 = vmatpush1.msra.mxu0 0.0
  %492 = vmatprep.subr.mxu0 0.0
  %493 = vmatpush1.msra.mxu0 0.0
  %494 = vmatprep.subr.mxu0 0.0
  %495 = vmatpush1.msra.mxu0 0.0
  %496 = vmatprep.subr.mxu0 0.0
  %497 = vmatpush1.msra.mxu0 0.0
  %498 = vmatprep.subr.mxu0 0.0
  %499 = vmatpush1.msra.mxu0 0.0
  %500 = vmatprep.subr.mxu0 0.0
  %501 = vmatpush1.msra.mxu0 0.0
  %502 = vmatprep.subr.mxu0 0.0
  %503 = vmatpush1.msra.mxu0 0.0
  %504 = vmatprep.subr.mxu0 0.0
  %505 = vmatpush1.msra.mxu0 0.0
  %506 = vmatprep.subr.mxu0 0.0
  %507 = vmatpush1.msra.mxu0 0.0
  %508 = vmatprep.subr.mxu0 0.0
  %509 = vmatpush1.msra.mxu0 0.0
  %510 = vmatprep.subr.mxu0 0.0
  %511 = vmatpush1.msra.mxu0 0.0
  %512 = vmatprep.subr.mxu0 0.0
  %513 = vmatpush1.msra.mxu0 0.0
  %514 = vmatprep.mubr.f32.mxu0 0.0
  %515 = vmatmul.mubr.f32.gmra.mrb[0].mxu0 %v448
  %v516 = vpop.f32.mrb[0].mxu0
  %v517 = vadd.f32 %v54, %v516
  %v518 = vpop.f32.mrb[0].mxu0
  %519 = vdwg.mxu0
  %v520 = vadd.f32 %v422, %v517
  %s521 = scalar_lea.vmem %s8, 24
  %522 = vst.msk [vmem:[%s521] sm:$0xff] %vm216, %v520
  %s523 = scalar_lea.vmem [#allocation3], 24
  %v524 = vld [vmem:[%s523] sm:$0xff]
  %526 = vset.pattern.permute.xlu0 0
  %527 = vperm.xlu0 %526, %v520
  %v528 = vpop.permute.xlu0 %527
  %v530 = vmul.f32 %v528, %v227
  %v531 = vadd.f32 %v524, %v530
  %532 = vset.pattern.permute.xlu0 1
  %533 = vperm.xlu0 %532, %v520
  %v534 = vpop.permute.xlu0 %533
  %v536 = vmul.f32 %v534, %v237
  %v537 = vadd.f32 %v531, %v536
  %538 = vset.pattern.permute.xlu0 2
  %539 = vperm.xlu0 %538, %v520
  %v540 = vpop.permute.xlu0 %539
  %v542 = vmul.f32 %v540, %v247
  %v543 = vadd.f32 %v537, %v542
  %v544 = vtanh.pop %v543
  %v546 = vsel %vm206, %v544, 0
  %548 = vmatprep.subr.mxu0 0.0
  %549 = vmatpush1.msra.mxu0 %v44
  %550 = vmatprep.subr.mxu0 0.0
  %551 = vmatpush1.msra.mxu0 %v45
  %552 = vmatprep.subr.mxu0 0.0
  %553 = vmatpush1.msra.mxu0 %v46
  %554 = vmatprep.subr.mxu0 0.0
  %555 = vmatpush1.msra.mxu0 %v47
  %556 = vmatprep.subr.mxu0 0.0
  %557 = vmatpush1.msra.mxu0 0.0
  %558 = vmatprep.subr.mxu0 0.0
  %559 = vmatpush1.msra.mxu0 0.0
  %560 = vmatprep.subr.mxu0 0.0
  %561 = vmatpush1.msra.mxu0 0.0
  %562 = vmatprep.subr.mxu0 0.0
  %563 = vmatpush1.msra.mxu0 0.0
  %564 = vmatprep.subr.mxu0 0.0
  %565 = vmatpush1.msra.mxu0 0.0
  %566 = vmatprep.subr.mxu0 0.0
  %567 = vmatpush1.msra.mxu0 0.0
  %568 = vmatprep.subr.mxu0 0.0
  %569 = vmatpush1.msra.mxu0 0.0
  %570 = vmatprep.subr.mxu0 0.0
  %571 = vmatpush1.msra.mxu0 0.0
  %572 = vmatprep.subr.mxu0 0.0
  %573 = vmatpush1.msra.mxu0 0.0
  %574 = vmatprep.subr.mxu0 0.0
  %575 = vmatpush1.msra.mxu0 0.0
  %576 = vmatprep.subr.mxu0 0.0
  %577 = vmatpush1.msra.mxu0 0.0
  %578 = vmatprep.subr.mxu0 0.0
  %579 = vmatpush1.msra.mxu0 0.0
  %580 = vmatprep.subr.mxu0 0.0
  %581 = vmatpush1.msra.mxu0 0.0
  %582 = vmatprep.subr.mxu0 0.0
  %583 = vmatpush1.msra.mxu0 0.0
  %584 = vmatprep.subr.mxu0 0.0
  %585 = vmatpush1.msra.mxu0 0.0
  %586 = vmatprep.subr.mxu0 0.0
  %587 = vmatpush1.msra.mxu0 0.0
  %588 = vmatprep.subr.mxu0 0.0
  %589 = vmatpush1.msra.mxu0 0.0
  %590 = vmatprep.subr.mxu0 0.0
  %591 = vmatpush1.msra.mxu0 0.0
  %592 = vmatprep.subr.mxu0 0.0
  %593 = vmatpush1.msra.mxu0 0.0
  %594 = vmatprep.subr.mxu0 0.0
  %595 = vmatpush1.msra.mxu0 0.0
  %596 = vmatprep.subr.mxu0 0.0
  %597 = vmatpush1.msra.mxu0 0.0
  %598 = vmatprep.subr.mxu0 0.0
  %599 = vmatpush1.msra.mxu0 0.0
  %600 = vmatprep.subr.mxu0 0.0
  %601 = vmatpush1.msra.mxu0 0.0
  %602 = vmatprep.subr.mxu0 0.0
  %603 = vmatpush1.msra.mxu0 0.0
  %604 = vmatprep.subr.mxu0 0.0
  %605 = vmatpush1.msra.mxu0 0.0
  %606 = vmatprep.subr.mxu0 0.0
  %607 = vmatpush1.msra.mxu0 0.0
  %608 = vmatprep.subr.mxu0 0.0
  %609 = vmatpush1.msra.mxu0 0.0
  %610 = vmatprep.subr.mxu0 0.0
  %611 = vmatpush1.msra.mxu0 0.0
  %612 = vmatprep.mubr.f32.mxu0 0.0
  %613 = vmatmul.mubr.f32.gmra.mrb[0].mxu0 %v546
  %v614 = vpop.f32.mrb[0].mxu0
  %v615 = vadd.f32 %v54, %v614
  %v616 = vpop.f32.mrb[0].mxu0
  %617 = vdwg.mxu0
  %v618 = vadd.f32 %v520, %v615
  %s619 = scalar_lea.vmem %s8, 32
  %620 = vst.msk [vmem:[%s619] sm:$0xff] %vm216, %v618
  %s621 = scalar_lea.vmem [#allocation3], 32
  %v622 = vld [vmem:[%s621] sm:$0xff]
  %624 = vset.pattern.permute.xlu0 0
  %625 = vperm.xlu0 %624, %v618
  %v626 = vpop.permute.xlu0 %625
  %v628 = vmul.f32 %v626, %v227
  %v629 = vadd.f32 %v622, %v628
  %630 = vset.pattern.permute.xlu0 1
  %631 = vperm.xlu0 %630, %v618
  %v632 = vpop.permute.xlu0 %631
  %v634 = vmul.f32 %v632, %v237
  %v635 = vadd.f32 %v629, %v634
  %636 = vset.pattern.permute.xlu0 2
  %637 = vperm.xlu0 %636, %v618
  %v638 = vpop.permute.xlu0 %637
  %v640 = vmul.f32 %v638, %v247
  %v641 = vadd.f32 %v635, %v640
  %v642 = vtanh.pop %v641
  %v644 = vsel %vm206, %v642, 0
  %646 = vmatprep.subr.mxu0 0.0
  %647 = vmatpush1.msra.mxu0 %v44
  %648 = vmatprep.subr.mxu0 0.0
  %649 = vmatpush1.msra.mxu0 %v45
  %650 = vmatprep.subr.mxu0 0.0
  %651 = vmatpush1.msra.mxu0 %v46
  %652 = vmatprep.subr.mxu0 0.0
  %653 = vmatpush1.msra.mxu0 %v47
  %654 = vmatprep.subr.mxu0 0.0
  %655 = vmatpush1.msra.mxu0 0.0
  %656 = vmatprep.subr.mxu0 0.0
  %657 = vmatpush1.msra.mxu0 0.0
  %658 = vmatprep.subr.mxu0 0.0
  %659 = vmatpush1.msra.mxu0 0.0
  %660 = vmatprep.subr.mxu0 0.0
  %661 = vmatpush1.msra.mxu0 0.0
  %662 = vmatprep.subr.mxu0 0.0
  %663 = vmatpush1.msra.mxu0 0.0
  %664 = vmatprep.subr.mxu0 0.0
  %665 = vmatpush1.msra.mxu0 0.0
  %666 = vmatprep.subr.mxu0 0.0
  %667 = vmatpush1.msra.mxu0 0.0
  %668 = vmatprep.subr.mxu0 0.0
  %669 = vmatpush1.msra.mxu0 0.0
  %670 = vmatprep.subr.mxu0 0.0
  %671 = vmatpush1.msra.mxu0 0.0
  %672 = vmatprep.subr.mxu0 0.0
  %673 = vmatpush1.msra.mxu0 0.0
  %674 = vmatprep.subr.mxu0 0.0
  %675 = vmatpush1.msra.mxu0 0.0
  %676 = vmatprep.subr.mxu0 0.0
  %677 = vmatpush1.msra.mxu0 0.0
  %678 = vmatprep.subr.mxu0 0.0
  %679 = vmatpush1.msra.mxu0 0.0
  %680 = vmatprep.subr.mxu0 0.0
  %681 = vmatpush1.msra.mxu0 0.0
  %682 = vmatprep.subr.mxu0 0.0
  %683 = vmatpush1.msra.mxu0 0.0
  %684 = vmatprep.subr.mxu0 0.0
  %685 = vmatpush1.msra.mxu0 0.0
  %686 = vmatprep.subr.mxu0 0.0
  %687 = vmatpush1.msra.mxu0 0.0
  %688 = vmatprep.subr.mxu0 0.0
  %689 = vmatpush1.msra.mxu0 0.0
  %690 = vmatprep.subr.mxu0 0.0
  %691 = vmatpush1.msra.mxu0 0.0
  %692 = vmatprep.subr.mxu0 0.0
  %693 = vmatpush1.msra.mxu0 0.0
  %694 = vmatprep.subr.mxu0 0.0
  %695 = vmatpush1.msra.mxu0 0.0
  %696 = vmatprep.subr.mxu0 0.0
  %697 = vmatpush1.msra.mxu0 0.0
  %698 = vmatprep.subr.mxu0 0.0
  %699 = vmatpush1.msra.mxu0 0.0
  %700 = vmatprep.subr.mxu0 0.0
  %701 = vmatpush1.msra.mxu0 0.0
  %702 = vmatprep.subr.mxu0 0.0
  %703 = vmatpush1.msra.mxu0 0.0
  %704 = vmatprep.subr.mxu0 0.0
  %705 = vmatpush1.msra.mxu0 0.0
  %706 = vmatprep.subr.mxu0 0.0
  %707 = vmatpush1.msra.mxu0 0.0
  %708 = vmatprep.subr.mxu0 0.0
  %709 = vmatpush1.msra.mxu0 0.0
  %710 = vmatprep.mubr.f32.mxu0 0.0
  %711 = vmatmul.mubr.f32.gmra.mrb[0].mxu0 %v644
  %v712 = vpop.f32.mrb[0].mxu0
  %v713 = vadd.f32 %v54, %v712
  %v714 = vpop.f32.mrb[0].mxu0
  %715 = vdwg.mxu0
  %v716 = vadd.f32 %v618, %v713
  %s717 = scalar_lea.vmem %s8, 40
  %718 = vst.msk [vmem:[%s717] sm:$0xff] %vm216, %v716
  %s719 = scalar_lea.vmem [#allocation3], 40
  %v720 = vld [vmem:[%s719] sm:$0xff]
  %722 = vset.pattern.permute.xlu0 0
  %723 = vperm.xlu0 %722, %v716
  %v724 = vpop.permute.xlu0 %723
  %v726 = vmul.f32 %v724, %v227
  %v727 = vadd.f32 %v720, %v726
  %728 = vset.pattern.permute.xlu0 1
  %729 = vperm.xlu0 %728, %v716
  %v730 = vpop.permute.xlu0 %729
  %v732 = vmul.f32 %v730, %v237
  %v733 = vadd.f32 %v727, %v732
  %734 = vset.pattern.permute.xlu0 2
  %735 = vperm.xlu0 %734, %v716
  %v736 = vpop.permute.xlu0 %735
  %v738 = vmul.f32 %v736, %v247
  %v739 = vadd.f32 %v733, %v738
  %v740 = vtanh.pop %v739
  %v742 = vsel %vm206, %v740, 0
  %744 = vmatprep.subr.mxu0 0.0
  %745 = vmatpush1.msra.mxu0 %v44
  %746 = vmatprep.subr.mxu0 0.0
  %747 = vmatpush1.msra.mxu0 %v45
  %748 = vmatprep.subr.mxu0 0.0
  %749 = vmatpush1.msra.mxu0 %v46
  %750 = vmatprep.subr.mxu0 0.0
  %751 = vmatpush1.msra.mxu0 %v47
  %752 = vmatprep.subr.mxu0 0.0
  %753 = vmatpush1.msra.mxu0 0.0
  %754 = vmatprep.subr.mxu0 0.0
  %755 = vmatpush1.msra.mxu0 0.0
  %756 = vmatprep.subr.mxu0 0.0
  %757 = vmatpush1.msra.mxu0 0.0
  %758 = vmatprep.subr.mxu0 0.0
  %759 = vmatpush1.msra.mxu0 0.0
  %760 = vmatprep.subr.mxu0 0.0
  %761 = vmatpush1.msra.mxu0 0.0
  %762 = vmatprep.subr.mxu0 0.0
  %763 = vmatpush1.msra.mxu0 0.0
  %764 = vmatprep.subr.mxu0 0.0
  %765 = vmatpush1.msra.mxu0 0.0
  %766 = vmatprep.subr.mxu0 0.0
  %767 = vmatpush1.msra.mxu0 0.0
  %768 = vmatprep.subr.mxu0 0.0
  %769 = vmatpush1.msra.mxu0 0.0
  %770 = vmatprep.subr.mxu0 0.0
  %771 = vmatpush1.msra.mxu0 0.0
  %772 = vmatprep.subr.mxu0 0.0
  %773 = vmatpush1.msra.mxu0 0.0
  %774 = vmatprep.subr.mxu0 0.0
  %775 = vmatpush1.msra.mxu0 0.0
  %776 = vmatprep.subr.mxu0 0.0
  %777 = vmatpush1.msra.mxu0 0.0
  %778 = vmatprep.subr.mxu0 0.0
  %779 = vmatpush1.msra.mxu0 0.0
  %780 = vmatprep.subr.mxu0 0.0
  %781 = vmatpush1.msra.mxu0 0.0
  %782 = vmatprep.subr.mxu0 0.0
  %783 = vmatpush1.msra.mxu0 0.0
  %784 = vmatprep.subr.mxu0 0.0
  %785 = vmatpush1.msra.mxu0 0.0
  %786 = vmatprep.subr.mxu0 0.0
  %787 = vmatpush1.msra.mxu0 0.0
  %788 = vmatprep.subr.mxu0 0.0
  %789 = vmatpush1.msra.mxu0 0.0
  %790 = vmatprep.subr.mxu0 0.0
  %791 = vmatpush1.msra.mxu0 0.0
  %792 = vmatprep.subr.mxu0 0.0
  %793 = vmatpush1.msra.mxu0 0.0
  %794 = vmatprep.subr.mxu0 0.0
  %795 = vmatpush1.msra.mxu0 0.0
  %796 = vmatprep.subr.mxu0 0.0
  %797 = vmatpush1.msra.mxu0 0.0
  %798 = vmatprep.subr.mxu0 0.0
  %799 = vmatpush1.msra.mxu0 0.0
  %800 = vmatprep.subr.mxu0 0.0
  %801 = vmatpush1.msra.mxu0 0.0
  %802 = vmatprep.subr.mxu0 0.0
  %803 = vmatpush1.msra.mxu0 0.0
  %804 = vmatprep.subr.mxu0 0.0
  %805 = vmatpush1.msra.mxu0 0.0
  %806 = vmatprep.subr.mxu0 0.0
  %807 = vmatpush1.msra.mxu0 0.0
  %808 = vmatprep.mubr.f32.mxu0 0.0
  %809 = vmatmul.mubr.f32.gmra.mrb[0].mxu0 %v742
  %v810 = vpop.f32.mrb[0].mxu0
  %v811 = vadd.f32 %v54, %v810
  %v812 = vpop.f32.mrb[0].mxu0
  %813 = vdwg.mxu0
  %v814 = vadd.f32 %v716, %v811
  %s815 = scalar_lea.vmem %s8, 48
  %816 = vst.msk [vmem:[%s815] sm:$0xff] %vm216, %v814
  %s817 = scalar_lea.vmem [#allocation3], 48
  %v818 = vld [vmem:[%s817] sm:$0xff]
  %820 = vset.pattern.permute.xlu0 0
  %821 = vperm.xlu0 %820, %v814
  %v822 = vpop.permute.xlu0 %821
  %v824 = vmul.f32 %v822, %v227
  %v825 = vadd.f32 %v818, %v824
  %826 = vset.pattern.permute.xlu0 1
  %827 = vperm.xlu0 %826, %v814
  %v828 = vpop.permute.xlu0 %827
  %v830 = vmul.f32 %v828, %v237
  %v831 = vadd.f32 %v825, %v830
  %832 = vset.pattern.permute.xlu0 2
  %833 = vperm.xlu0 %832, %v814
  %v834 = vpop.permute.xlu0 %833
  %v836 = vmul.f32 %v834, %v247
  %v837 = vadd.f32 %v831, %v836
  %v838 = vtanh.pop %v837
  %v840 = vsel %vm206, %v838, 0
  %842 = vmatprep.subr.mxu0 0.0
  %843 = vmatpush1.msra.mxu0 %v44
  %844 = vmatprep.subr.mxu0 0.0
  %845 = vmatpush1.msra.mxu0 %v45
  %846 = vmatprep.subr.mxu0 0.0
  %847 = vmatpush1.msra.mxu0 %v46
  %848 = vmatprep.subr.mxu0 0.0
  %849 = vmatpush1.msra.mxu0 %v47
  %850 = vmatprep.subr.mxu0 0.0
  %851 = vmatpush1.msra.mxu0 0.0
  %852 = vmatprep.subr.mxu0 0.0
  %853 = vmatpush1.msra.mxu0 0.0
  %854 = vmatprep.subr.mxu0 0.0
  %855 = vmatpush1.msra.mxu0 0.0
  %856 = vmatprep.subr.mxu0 0.0
  %857 = vmatpush1.msra.mxu0 0.0
  %858 = vmatprep.subr.mxu0 0.0
  %859 = vmatpush1.msra.mxu0 0.0
  %860 = vmatprep.subr.mxu0 0.0
  %861 = vmatpush1.msra.mxu0 0.0
  %862 = vmatprep.subr.mxu0 0.0
  %863 = vmatpush1.msra.mxu0 0.0
  %864 = vmatprep.subr.mxu0 0.0
  %865 = vmatpush1.msra.mxu0 0.0
  %866 = vmatprep.subr.mxu0 0.0
  %867 = vmatpush1.msra.mxu0 0.0
  %868 = vmatprep.subr.mxu0 0.0
  %869 = vmatpush1.msra.mxu0 0.0
  %870 = vmatprep.subr.mxu0 0.0
  %871 = vmatpush1.msra.mxu0 0.0
  %872 = vmatprep.subr.mxu0 0.0
  %873 = vmatpush1.msra.mxu0 0.0
  %874 = vmatprep.subr.mxu0 0.0
  %875 = vmatpush1.msra.mxu0 0.0
  %876 = vmatprep.subr.mxu0 0.0
  %877 = vmatpush1.msra.mxu0 0.0
  %878 = vmatprep.subr.mxu0 0.0
  %879 = vmatpush1.msra.mxu0 0.0
  %880 = vmatprep.subr.mxu0 0.0
  %881 = vmatpush1.msra.mxu0 0.0
  %882 = vmatprep.subr.mxu0 0.0
  %883 = vmatpush1.msra.mxu0 0.0
  %884 = vmatprep.subr.mxu0 0.0
  %885 = vmatpush1.msra.mxu0 0.0
  %886 = vmatprep.subr.mxu0 0.0
  %887 = vmatpush1.msra.mxu0 0.0
  %888 = vmatprep.subr.mxu0 0.0
  %889 = vmatpush1.msra.mxu0 0.0
  %890 = vmatprep.subr.mxu0 0.0
  %891 = vmatpush1.msra.mxu0 0.0
  %892 = vmatprep.subr.mxu0 0.0
  %893 = vmatpush1.msra.mxu0 0.0
  %894 = vmatprep.subr.mxu0 0.0
  %895 = vmatpush1.msra.mxu0 0.0
  %896 = vmatprep.subr.mxu0 0.0
  %897 = vmatpush1.msra.mxu0 0.0
  %898 = vmatprep.subr.mxu0 0.0
  %899 = vmatpush1.msra.mxu0 0.0
  %900 = vmatprep.subr.mxu0 0.0
  %901 = vmatpush1.msra.mxu0 0.0
  %902 = vmatprep.subr.mxu0 0.0
  %903 = vmatpush1.msra.mxu0 0.0
  %904 = vmatprep.subr.mxu0 0.0
  %905 = vmatpush1.msra.mxu0 0.0
  %906 = vmatprep.mubr.f32.mxu0 0.0
  %907 = vmatmul.mubr.f32.gmra.mrb[0].mxu0 %v840
  %v908 = vpop.f32.mrb[0].mxu0
  %v909 = vadd.f32 %v54, %v908
  %v910 = vpop.f32.mrb[0].mxu0
  %911 = vdwg.mxu0
  %v912 = vadd.f32 %v814, %v909
  %s913 = scalar_lea.vmem %s8, 56
  %914 = vst.msk [vmem:[%s913] sm:$0xff] %vm216, %v912
  %s915 = scalar_lea.vmem [#allocation3], 56
  %v916 = vld [vmem:[%s915] sm:$0xff]
  %918 = vset.pattern.permute.xlu0 0
  %919 = vperm.xlu0 %918, %v912
  %v920 = vpop.permute.xlu0 %919
  %v922 = vmul.f32 %v920, %v227
  %v923 = vadd.f32 %v916, %v922
  %924 = vset.pattern.permute.xlu0 1
  %925 = vperm.xlu0 %924, %v912
  %v926 = vpop.permute.xlu0 %925
  %v928 = vmul.f32 %v926, %v237
  %v929 = vadd.f32 %v923, %v928
  %930 = vset.pattern.permute.xlu0 2
  %931 = vperm.xlu0 %930, %v912
  %v932 = vpop.permute.xlu0 %931
  %v934 = vmul.f32 %v932, %v247
  %v935 = vadd.f32 %v929, %v934
  %v936 = vtanh.pop %v935
  %v938 = vsel %vm206, %v936, 0
  %940 = vmatprep.subr.mxu0 0.0
  %941 = vmatpush1.msra.mxu0 %v44
  %942 = vmatprep.subr.mxu0 0.0
  %943 = vmatpush1.msra.mxu0 %v45
  %944 = vmatprep.subr.mxu0 0.0
  %945 = vmatpush1.msra.mxu0 %v46
  %946 = vmatprep.subr.mxu0 0.0
  %947 = vmatpush1.msra.mxu0 %v47
  %948 = vmatprep.subr.mxu0 0.0
  %949 = vmatpush1.msra.mxu0 0.0
  %950 = vmatprep.subr.mxu0 0.0
  %951 = vmatpush1.msra.mxu0 0.0
  %952 = vmatprep.subr.mxu0 0.0
  %953 = vmatpush1.msra.mxu0 0.0
  %954 = vmatprep.subr.mxu0 0.0
  %955 = vmatpush1.msra.mxu0 0.0
  %956 = vmatprep.subr.mxu0 0.0
  %957 = vmatpush1.msra.mxu0 0.0
  %958 = vmatprep.subr.mxu0 0.0
  %959 = vmatpush1.msra.mxu0 0.0
  %960 = vmatprep.subr.mxu0 0.0
  %961 = vmatpush1.msra.mxu0 0.0
  %962 = vmatprep.subr.mxu0 0.0
  %963 = vmatpush1.msra.mxu0 0.0
  %964 = vmatprep.subr.mxu0 0.0
  %965 = vmatpush1.msra.mxu0 0.0
  %966 = vmatprep.subr.mxu0 0.0
  %967 = vmatpush1.msra.mxu0 0.0
  %968 = vmatprep.subr.mxu0 0.0
  %969 = vmatpush1.msra.mxu0 0.0
  %970 = vmatprep.subr.mxu0 0.0
  %971 = vmatpush1.msra.mxu0 0.0
  %972 = vmatprep.subr.mxu0 0.0
  %973 = vmatpush1.msra.mxu0 0.0
  %974 = vmatprep.subr.mxu0 0.0
  %975 = vmatpush1.msra.mxu0 0.0
  %976 = vmatprep.subr.mxu0 0.0
  %977 = vmatpush1.msra.mxu0 0.0
  %978 = vmatprep.subr.mxu0 0.0
  %979 = vmatpush1.msra.mxu0 0.0
  %980 = vmatprep.subr.mxu0 0.0
  %981 = vmatpush1.msra.mxu0 0.0
  %982 = vmatprep.subr.mxu0 0.0
  %983 = vmatpush1.msra.mxu0 0.0
  %984 = vmatprep.subr.mxu0 0.0
  %985 = vmatpush1.msra.mxu0 0.0
  %986 = vmatprep.subr.mxu0 0.0
  %987 = vmatpush1.msra.mxu0 0.0
  %988 = vmatprep.subr.mxu0 0.0
  %989 = vmatpush1.msra.mxu0 0.0
  %990 = vmatprep.subr.mxu0 0.0
  %991 = vmatpush1.msra.mxu0 0.0
  %992 = vmatprep.subr.mxu0 0.0
  %993 = vmatpush1.msra.mxu0 0.0
  %994 = vmatprep.subr.mxu0 0.0
  %995 = vmatpush1.msra.mxu0 0.0
  %996 = vmatprep.subr.mxu0 0.0
  %997 = vmatpush1.msra.mxu0 0.0
  %998 = vmatprep.subr.mxu0 0.0
  %999 = vmatpush1.msra.mxu0 0.0
  %1000 = vmatprep.subr.mxu0 0.0
  %1001 = vmatpush1.msra.mxu0 0.0
  %1002 = vmatprep.subr.mxu0 0.0
  %1003 = vmatpush1.msra.mxu0 0.0
  %1004 = vmatprep.mubr.f32.mxu0 0.0
  %1005 = vmatmul.mubr.f32.gmra.mrb[0].mxu0 %v938
  %v1006 = vpop.f32.mrb[0].mxu0
  %v1007 = vadd.f32 %v54, %v1006
  %v1008 = vpop.f32.mrb[0].mxu0
  %1009 = vdwg.mxu0
  %v1010 = vadd.f32 %v912, %v1007
  %1011 = vst.msk [vmem:[#allocation2] sm:$0xff] %vm216, %v1010
  // Predicated region
  $region38: #{tpu_custom_call.1} parent=0 // pred_check
    _
  $region39: #{tpu_custom_call.1} parent=0 // pred_check_branch
    %1013 = sbr.rel (0) target = $region41
  $region40: #{tpu_custom_call.1} parent=0 // pred_region
    _
  $region41: #{tpu_custom_call.1} parent=0 // pred_fallthru
    _
  // Predicated region
  $region42: #{tpu_custom_call.1} parent=0 // pred_check
    _
  $region43: #{tpu_custom_call.1} parent=0 // pred_check_branch
    %1015 = sbr.rel (0) target = $region45
  $region44: #{tpu_custom_call.1} parent=0 // pred_region
    _
  $region45: #{tpu_custom_call.1} parent=0 // pred_fallthru
    _

</llo_original>
